<compile_context>
chip_gen: v5e
topology: v5e:2x2
jax: 0.10.0
libtpu: 0.0.40
codegen_flags: <defaults>
</compile_context>

<pallas_src>
import functools

import jax
import jax.numpy as jnp
from jax.experimental import pallas as pl
from jax.experimental.pallas import tpu as pltpu

BN_EPS = 1e-5       # PyTorch BatchNorm1d default
SWIN_FEAT = 768     # swin_t head.in_features
RES_FEAT = 2048     # resnet50 fc.in_features
HEAD_W = 150        # each replaced head's out_features
PAD_W = 256         # 150 zero-padded to a multiple of 128
HID = 2 * PAD_W     # packed (swin | resnet) lane width = 512


def swinres_kernel(
    x_ref,      # [B, tk]      bf16  flattened image tile (K-tile of D_in)
    wh_ref,     # [tk, 512]    bf16  packed (backbone @ BN-folded head) weights
    bh_ref,     # [1, 512]     f32   packed BN-folded head biases (zero pad)
    wfc_ref,    # [512, OUT]   bf16  final linear, rows zero on pad lanes
    bfc_ref,    # [1, OUT]     f32   final linear bias
    out_ref,    # [B, OUT]     f32
    acc_ref,    # [B, 512]     f32   VMEM accumulator over the K grid axis
):
    k = pl.program_id(0)

    @pl.when(k == 0)
    def _init():
        acc_ref[...] = jnp.zeros_like(acc_ref)

    # Stand-in backbone + head + BN, all folded into one bf16 matmul (f32 acc).
    acc_ref[...] += jnp.dot(
        x_ref[...], wh_ref[...], preferred_element_type=jnp.float32
    )

    @pl.when(k == pl.num_programs(0) - 1)
    def _finalize():
        # + folded BN/head bias, then ReLU (Dropout(0.4) is identity in eval).
        y = jnp.maximum(acc_ref[...] + bh_ref[...], 0.0).astype(wfc_ref.dtype)
        # Final Linear(300 -> OUT): concat replaced by the packed 512-lane
        # layout; padded wfc rows are exactly zero.
        out = jnp.dot(y, wfc_ref[...], preferred_element_type=jnp.float32)
        out_ref[...] = (out + bfc_ref[...]).astype(out_ref.dtype)


def prepare_params(params, out_features):
    """One-time host-side folding: BN -> heads, backbones -> heads, pad/pack, bf16."""
    gamma, beta = params["bn_gamma"], params["bn_beta"]
    mean, var = params["bn_mean"], params["bn_var"]
    scale = gamma * jax.lax.rsqrt(var + BN_EPS)                  # [1, 300]

    scale_s, scale_r = scale[:, :HEAD_W], scale[:, HEAD_W:]
    beta_s, beta_r = beta[:, :HEAD_W], beta[:, HEAD_W:]
    mean_s, mean_r = mean[:, :HEAD_W], mean[:, HEAD_W:]

    # Fold eval-mode BatchNorm into the two heads (affine commutes with Linear).
    ws_f = params["ws"] * scale_s                                # [768, 150]
    bs_f = (params["bs"] - mean_s) * scale_s + beta_s            # [1, 150]
    wr_f = params["wr"] * scale_r                                # [2048, 150]
    br_f = (params["br"] - mean_r) * scale_r + beta_r            # [1, 150]

    # Pre-contract the linear stand-in backbones with the folded heads.
    # TODO(synk): only valid while the backbones are linear placeholders.
    w_s = params["wps"] @ ws_f                                   # [D_in, 150]
    w_r = params["wpr"] @ wr_f                                   # [D_in, 150]
    d_in = w_s.shape[0]

    # Pack the two halves at lane-aligned 256-column offsets -> [D_in, 512].
    w_heads = jnp.zeros((d_in, HID), jnp.float32)
    w_heads = w_heads.at[:, :HEAD_W].set(w_s)
    w_heads = w_heads.at[:, PAD_W:PAD_W + HEAD_W].set(w_r)
    b_heads = jnp.zeros((1, HID), jnp.float32)
    b_heads = b_heads.at[:, :HEAD_W].set(bs_f)
    b_heads = b_heads.at[:, PAD_W:PAD_W + HEAD_W].set(br_f)

    # Final Linear(300, OUT) rows re-packed into the same 512-lane layout;
    # padding rows are zero so the zero-padded lanes cannot leak.
    wfc = params["wfc"]                                          # [300, OUT]
    wfc_p = jnp.zeros((HID, out_features), jnp.float32)
    wfc_p = wfc_p.at[:HEAD_W].set(wfc[:HEAD_W])
    wfc_p = wfc_p.at[PAD_W:PAD_W + HEAD_W].set(wfc[HEAD_W:])

    return {
        "w_heads": w_heads.astype(jnp.bfloat16),
        "b_heads": b_heads,
        "wfc": wfc_p.astype(jnp.bfloat16),
        "bfc": params["bfc"],
    }


@jax.jit
def swinres_forward(x, prep):
    """x: [B, C, H, W] float32 (NCHW). prep: output of prepare_params."""
    B = x.shape[0]
    out_features = prep["wfc"].shape[1]

    x_flat = x.reshape(B, -1).astype(jnp.bfloat16)
    d_in = x_flat.shape[1]

    # K-tiling of the reduction (D_in) axis: single step for small inputs,
    # 2048-wide tiles (8 MiB of bf16 weight per double-buffered block) for
    # realistic image sizes so v7x's 64 MiB VMEM is never exceeded.
    k128 = ((d_in + 127) // 128) * 128
    tk = min(k128, 2048)
    k_pad = pl.cdiv(d_in, tk) * tk
    nk = k_pad // tk

    w_heads = prep["w_heads"]
    if k_pad != d_in:
        x_flat = jnp.pad(x_flat, ((0, 0), (0, k_pad - d_in)))
        w_heads = jnp.pad(w_heads, ((0, k_pad - d_in), (0, 0)))

    cost = pl.CostEstimate(
        flops=2 * B * k_pad * HID + 2 * B * HID * out_features,
        transcendentals=0,
        bytes_accessed=(
            x_flat.size * 2 + w_heads.size * 2 + prep["b_heads"].size * 4
            + prep["wfc"].size * 2 + prep["bfc"].size * 4
            + B * out_features * 4
        ),
    )

    return pl.pallas_call(
        swinres_kernel,
        out_shape=jax.ShapeDtypeStruct((B, out_features), jnp.float32),
        grid=(nk,),
        in_specs=[
            pl.BlockSpec((B, tk), lambda k: (0, k)),             # x K-tile
            pl.BlockSpec((tk, HID), lambda k: (k, 0)),           # packed weights
            pl.BlockSpec((1, HID), lambda k: (0, 0)),            # packed biases
            pl.BlockSpec((HID, out_features), lambda k: (0, 0)),  # final W
            pl.BlockSpec((1, out_features), lambda k: (0, 0)),   # final bias
        ],
        out_specs=pl.BlockSpec((B, out_features), lambda k: (0, 0)),
        scratch_shapes=[pltpu.VMEM((B, HID), jnp.float32)],
        compiler_params=pltpu.CompilerParams(
            dimension_semantics=("arbitrary",),   # K axis is a reduction
        ),
        cost_estimate=cost,
    )(x_flat, w_heads, prep["b_heads"], prep["wfc"], prep["bfc"])


def init_params(key, d_in, out_features=5):
    """Deterministic params matching the shapes implied by SwinResModel.__init__."""
    ks = jax.random.split(key, 8)

    def lin_w(k, fan_in, fan_out):
        bound = 1.0 / jnp.sqrt(fan_in)
        return jax.random.uniform(k, (fan_in, fan_out), jnp.float32, -bound, bound)

    return {
        # stand-in backbone projections (TODO(synk): real backbones not translated)
        "wps": lin_w(ks[0], d_in, SWIN_FEAT),
        "wpr": lin_w(ks[1], d_in, RES_FEAT),
        # swin head: Linear(768, 150)
        "ws": lin_w(ks[2], SWIN_FEAT, HEAD_W),
        "bs": jax.random.uniform(ks[3], (1, HEAD_W), jnp.float32, -0.02, 0.02),
        # resnet fc: Linear(2048, 150)
        "wr": lin_w(ks[4], RES_FEAT, HEAD_W),
        "br": jax.random.uniform(ks[5], (1, HEAD_W), jnp.float32, -0.02, 0.02),
        # BatchNorm1d(300) — PyTorch defaults (eval mode uses running stats)
        "bn_gamma": jnp.ones((1, 2 * HEAD_W), jnp.float32),
        "bn_beta": jnp.zeros((1, 2 * HEAD_W), jnp.float32),
        "bn_mean": jnp.zeros((1, 2 * HEAD_W), jnp.float32),
        "bn_var": jnp.ones((1, 2 * HEAD_W), jnp.float32),
        # final Linear(300, out_features)
        "wfc": lin_w(ks[6], 2 * HEAD_W, out_features),
        "bfc": jax.random.uniform(ks[7], (1, out_features), jnp.float32, -0.05, 0.05),
    }


def reference_forward(x, params):
    """Pure-JAX f32 reference mirroring SwinResModel.forward (eval mode)."""
    B = x.shape[0]
    xf = x.reshape(B, -1)
    h_s = (xf @ params["wps"]) @ params["ws"] + params["bs"]
    h_r = (xf @ params["wpr"]) @ params["wr"] + params["br"]
    cat = jnp.concatenate([h_s, h_r], axis=1)
    y = (cat - params["bn_mean"]) * jax.lax.rsqrt(params["bn_var"] + BN_EPS)
    y = y * params["bn_gamma"] + params["bn_beta"]
    y = jnp.maximum(y, 0.0)
    return y @ params["wfc"] + params["bfc"]


if __name__ == "__main__":
    B, C, H, W = 8, 3, 16, 16   # small NCHW input (3 channels as the backbones expect)
    OUT = 5

    key = jax.random.PRNGKey(0)
    k_x, k_p = jax.random.split(key)

    x = jax.random.normal(k_x, (B, C, H, W), jnp.float32)
    params = init_params(k_p, d_in=C * H * W, out_features=OUT)
    prep = prepare_params(params, out_features=OUT)

    out = swinres_forward(x, prep)
    out = jax.block_until_ready(out)

    assert out.shape == (B, OUT), out.shape
    assert jnp.all(jnp.isfinite(out))

    ref = reference_forward(x, params)
    assert jnp.allclose(out, ref, rtol=5e-2, atol=5e-2), (
        "max abs diff", float(jnp.max(jnp.abs(out - ref))))
    print("KERNEL_OK")
</pallas_src>

<mosaic_0001>
module attributes {stable_mosaic.version = 11 : i64} {
  func.func @swinres_kernel(%arg0: i32, %arg1: memref<8x768xbf16, #tpu.memory_space<vmem>>, %arg2: memref<768x512xbf16, #tpu.memory_space<vmem>>, %arg3: memref<1x512xf32, #tpu.memory_space<vmem>>, %arg4: memref<512x5xbf16, #tpu.memory_space<vmem>>, %arg5: memref<1x5xf32, #tpu.memory_space<vmem>>, %arg6: memref<8x5xf32, #tpu.memory_space<vmem>>, %arg7: memref<8x512xf32, #tpu.memory_space<vmem>>) attributes {dimension_semantics = [#tpu.dimension_semantics<arbitrary>], iteration_bounds = array<i64: 1>, scalar_prefetch = 0 : i64, scratch_operands = 1 : i64, tpu.core_type = #tpu.core_type<tc>, window_params = [{transform_indices = @transform_0, window_bounds = array<i64: 8, 768>}, {transform_indices = @transform_1, window_bounds = array<i64: 768, 512>}, {pipeline_mode = #tpu.pipeline_mode<synchronous>, transform_indices = @transform_2, window_bounds = array<i64: 1, 512>}, {pipeline_mode = #tpu.pipeline_mode<synchronous>, transform_indices = @transform_3, window_bounds = array<i64: 512, 5>}, {pipeline_mode = #tpu.pipeline_mode<synchronous>, transform_indices = @transform_4, window_bounds = array<i64: 1, 5>}, {pipeline_mode = #tpu.pipeline_mode<synchronous>, transform_indices = @transform_5, window_bounds = array<i64: 8, 5>}]} {
    %c0_i32 = arith.constant 0 : i32
    %0 = arith.cmpi eq, %arg0, %c0_i32 : i32
    %1 = arith.extui %0 : i1 to i32
    %c0_i32_0 = arith.constant 0 : i32
    %2 = arith.cmpi ne, %1, %c0_i32_0 : i32
    scf.if %2 {
      %cst_10 = arith.constant 0.000000e+00 : f32
      %12 = vector.broadcast %cst_10 : f32 to vector<8x512xf32>
      %c0_11 = arith.constant 0 : index
      %c0_12 = arith.constant 0 : index
      %13 = vector.load %arg7[%c0_11, %c0_12] : memref<8x512xf32, #tpu.memory_space<vmem>>, vector<8x512xf32>
      tpu.vector_store %arg7[%c0_11, %c0_12], %12 {strides = array<i32>} : memref<8x512xf32, #tpu.memory_space<vmem>>, vector<8x512xf32>,
    } else {
    }
    %c0 = arith.constant 0 : index
    %c0_1 = arith.constant 0 : index
    %3 = vector.load %arg7[%c0, %c0_1] : memref<8x512xf32, #tpu.memory_space<vmem>>, vector<8x512xf32>
    %c0_2 = arith.constant 0 : index
    %c0_3 = arith.constant 0 : index
    %4 = vector.load %arg1[%c0_2, %c0_3] : memref<8x768xbf16, #tpu.memory_space<vmem>>, vector<8x768xbf16>
    %c0_4 = arith.constant 0 : index
    %c0_5 = arith.constant 0 : index
    %5 = vector.load %arg2[%c0_4, %c0_5] : memref<768x512xbf16, #tpu.memory_space<vmem>>, vector<768x512xbf16>
    %cst = arith.constant dense<0.000000e+00> : vector<8x512xf32>
    %6 = tpu.matmul %4, %5, %cst {dimension_numbers = #tpu.dot_dimension_numbers<[1], [0], [0], [1], [0, 0, 1, 1], [], []>} : vector<8x768xbf16>, vector<768x512xbf16>, vector<8x512xf32> -> vector<8x512xf32>
    %7 = arith.addf %3, %6 : vector<8x512xf32>
    %c0_6 = arith.constant 0 : index
    %c0_7 = arith.constant 0 : index
    %8 = vector.load %arg7[%c0_6, %c0_7] : memref<8x512xf32, #tpu.memory_space<vmem>>, vector<8x512xf32>
    tpu.vector_store %arg7[%c0_6, %c0_7], %7 {strides = array<i32>} : memref<8x512xf32, #tpu.memory_space<vmem>>, vector<8x512xf32>,
    %c0_i32_8 = arith.constant 0 : i32
    %9 = arith.cmpi eq, %arg0, %c0_i32_8 : i32
    %10 = arith.extui %9 : i1 to i32
    %c0_i32_9 = arith.constant 0 : i32
    %11 = arith.cmpi ne, %10, %c0_i32_9 : i32
    scf.if %11 {
      %c0_10 = arith.constant 0 : index
      %c0_11 = arith.constant 0 : index
      %12 = vector.load %arg7[%c0_10, %c0_11] : memref<8x512xf32, #tpu.memory_space<vmem>>, vector<8x512xf32>
      %c0_12 = arith.constant 0 : index
      %c0_13 = arith.constant 0 : index
      %13 = vector.load %arg3[%c0_12, %c0_13] : memref<1x512xf32, #tpu.memory_space<vmem>>, vector<1x512xf32>
      %14 = vector.broadcast %13 : vector<1x512xf32> to vector<8x512xf32>
      %15 = arith.addf %12, %14 : vector<8x512xf32>
      %cst_14 = arith.constant 0.000000e+00 : f32
      %16 = vector.broadcast %cst_14 : f32 to vector<8x512xf32>
      %17 = arith.maximumf %15, %16 : vector<8x512xf32>
      %18 = arith.truncf %17 : vector<8x512xf32> to vector<8x512xbf16>
      %c0_15 = arith.constant 0 : index
      %c0_16 = arith.constant 0 : index
      %19 = vector.load %arg4[%c0_15, %c0_16] : memref<512x5xbf16, #tpu.memory_space<vmem>>, vector<512x5xbf16>
      %cst_17 = arith.constant dense<0.000000e+00> : vector<8x5xf32>
      %20 = tpu.matmul %18, %19, %cst_17 {dimension_numbers = #tpu.dot_dimension_numbers<[1], [0], [0], [1], [0, 0, 1, 1], [], []>} : vector<8x512xbf16>, vector<512x5xbf16>, vector<8x5xf32> -> vector<8x5xf32>
      %c0_18 = arith.constant 0 : index
      %c0_19 = arith.constant 0 : index
      %21 = vector.load %arg5[%c0_18, %c0_19] : memref<1x5xf32, #tpu.memory_space<vmem>>, vector<1x5xf32>
      %22 = vector.broadcast %21 : vector<1x5xf32> to vector<8x5xf32>
      %23 = arith.addf %20, %22 : vector<8x5xf32>
      %c0_20 = arith.constant 0 : index
      %c0_21 = arith.constant 0 : index
      %24 = vector.load %arg6[%c0_20, %c0_21] : memref<8x5xf32, #tpu.memory_space<vmem>>, vector<8x5xf32>
      tpu.vector_store %arg6[%c0_20, %c0_21], %23 {strides = array<i32>} : memref<8x5xf32, #tpu.memory_space<vmem>>, vector<8x5xf32>,
    } else {
    }
    return
  }
  func.func @transform_0(%arg0: i32) -> (i32, i32) {
    %c0_i32 = arith.constant 0 : i32
    %c0_i32_0 = arith.constant 0 : i32
    return %c0_i32, %arg0 : i32, i32
  }
  func.func @transform_1(%arg0: i32) -> (i32, i32) {
    %c0_i32 = arith.constant 0 : i32
    %c0_i32_0 = arith.constant 0 : i32
    return %arg0, %c0_i32 : i32, i32
  }
  func.func @transform_2(%arg0: i32) -> (i32, i32) {
    %c0_i32 = arith.constant 0 : i32
    %c0_i32_0 = arith.constant 0 : i32
    %c0_i32_1 = arith.constant 0 : i32
    return %c0_i32, %c0_i32_0 : i32, i32
  }
  func.func @transform_3(%arg0: i32) -> (i32, i32) {
    %c0_i32 = arith.constant 0 : i32
    %c0_i32_0 = arith.constant 0 : i32
    %c0_i32_1 = arith.constant 0 : i32
    return %c0_i32, %c0_i32_0 : i32, i32
  }
  func.func @transform_4(%arg0: i32) -> (i32, i32) {
    %c0_i32 = arith.constant 0 : i32
    %c0_i32_0 = arith.constant 0 : i32
    %c0_i32_1 = arith.constant 0 : i32
    return %c0_i32, %c0_i32_0 : i32, i32
  }
  func.func @transform_5(%arg0: i32) -> (i32, i32) {
    %c0_i32 = arith.constant 0 : i32
    %c0_i32_0 = arith.constant 0 : i32
    %c0_i32_1 = arith.constant 0 : i32
    return %c0_i32, %c0_i32_0 : i32, i32
  }
}

</mosaic_0001>

<llo_original>
// kernel: swinres_forward.1
$region0: #{swinres_forward.1}
  #allocation0 [shape = 'u32[]', space=smem, size = 0x4, offset = 0x4, fixed_abs, tag = 'smem constant byte address 0x4 - core index']
  #allocation1 [shape = 'u32[72,128]{1,0:T(1,128)}', space=vmem, size = 0x9000, scoped, tag = 'internal scratch']
  #allocation2 [shape = 'f32[8,512]{1,0:T(8,128)}', space=vmem, size = 0x4000, scoped, tag = 'scratch operand']
  %s0 = inlined_call_operand.vmem [shape: bf16[8,768], index: 0, kind: input, shape index: {}]
  %s1 = inlined_call_operand.hbm [shape: bf16[768,512], index: 1, kind: input, shape index: {}]
  %s2 = inlined_call_operand.vmem [shape: f32[1,512], index: 2, kind: input, shape index: {}]
  %s3 = inlined_call_operand.vmem [shape: bf16[512,5], index: 3, kind: input, shape index: {}]
  %s4 = inlined_call_operand.vmem [shape: f32[1,5], index: 4, kind: input, shape index: {}]
  %s5 = inlined_call_operand.hbm [shape: f32[8,5], index: 5, kind: output, shape index: {}]
  %s6 = sld [smem:[#allocation0]]
  $region42: #{swinres_forward.1} parent=0
    _
  %s8 = ssub.s32 1, %s6
  %s9 = scalar_select 0, %s8, %s6
  $region1: #{swinres_forward.1} parent=0
    #allocation3 [shape = 'u8[786432]{0}', space=vmem, size = 0xc0000, scoped, tag = 'input window, operand 1, single buffered']
    #allocation4 [shape = 's32[1]{0}', space=sflag, size = 0x4, scoped, tag = 'scoped memory for swinres_forward.1']
    #allocation5 [shape = 's32[1]{0}', space=sflag, size = 0x4, scoped, tag = 'scoped memory for swinres_forward.1']
    #allocation6 [shape = 'u8[4096]{0}', space=vmem, size = 0x1000, scoped, tag = 'output window, operand 0, single buffered']
    %10 = vsyncpa [#allocation4], 0
    %11 = vsyncpa [#allocation5], 0
    // Predicated region
    $region2: #{swinres_forward.1} parent=1 // pred_check
      _
    $region3: #{swinres_forward.1} parent=1 // pred_check_branch
      %13 = sbr.rel (0) target = $region5
    $region4: #{swinres_forward.1} parent=1 // pred_region
      _
    $region5: #{swinres_forward.1} parent=1 // pred_fallthru
      _
    // Predicated region
    $region6: #{swinres_forward.1} parent=1 // pred_check
      _
    $region7: #{swinres_forward.1} parent=1 // pred_check_branch
      %15 = sbr.rel (0) target = $region9
    $region8: #{swinres_forward.1} parent=1 // pred_region
      %17 = vsyncadd [#allocation4], 0
      %s18 = sshll.u32 %s1, 4
      %s19 = int_to_ptr.hbm [resolvable:$true] %s18
      %s20 = sshll.u32 [#allocation3], 4
      %s21 = int_to_ptr.vmem [resolvable:$true] %s20
      %26 = dma.hbm_to_vmem [thread:$0]  %s19, 24576, %s21, [#allocation4], 256, 256, 16
    $region9: #{swinres_forward.1} parent=1 // pred_fallthru
      _
    // Predicated region
    $region10: #{swinres_forward.1} parent=1 // pred_check
      _
    $region11: #{swinres_forward.1} parent=1 // pred_check_branch
      %28 = sbr.rel (0) target = $region13
    $region12: #{swinres_forward.1} parent=1 // pred_region
      _
    $region13: #{swinres_forward.1} parent=1 // pred_fallthru
      _
    // Predicated region
    $region14: #{swinres_forward.1} parent=1 // pred_check
      _
    $region15: #{swinres_forward.1} parent=1 // pred_check_branch
      %30 = sbr.rel (0) target = $region17
    $region16: #{swinres_forward.1} parent=1 // pred_region
      _
    $region17: #{swinres_forward.1} parent=1 // pred_fallthru
      _
    // Predicated region
    $region18: #{swinres_forward.1} parent=1 // pred_check
      _
    $region19: #{swinres_forward.1} parent=1 // pred_check_branch
      %32 = sbr.rel (0) target = $region21
    $region20: #{swinres_forward.1} parent=1 // pred_region
      _
    $region21: #{swinres_forward.1} parent=1 // pred_fallthru
      _
    // Predicated region
    $region22: #{swinres_forward.1} parent=1 // pred_check
      _
    $region23: #{swinres_forward.1} parent=1 // pred_check_branch
      %34 = sbr.rel (0) target = $region25
    $region24: #{swinres_forward.1} parent=1 // pred_region
      %36 = dma.done [#allocation4], 24576
    $region25: #{swinres_forward.1} parent=1 // pred_fallthru
      _
    %p37 = scmp.eq.s32.totalorder 0, 0
    // Predicated region
    $region26: #{swinres_forward.1} parent=1 // pred_check
      %p38 = pneg %p37
    $region27: #{swinres_forward.1} parent=1 // pred_check_branch
      %40 = sbr.rel (%p38) target = $region29
    $region28: #{swinres_forward.1} parent=1 // pred_region
      %41 = vst [vmem:[#allocation2] sm:$0xff] 0.0
      %42 = vst [vmem:[#allocation2 + $0x8] sm:$0xff] 0.0
      %43 = vst [vmem:[#allocation2 + $0x10] sm:$0xff] 0.0
      %44 = vst [vmem:[#allocation2 + $0x18] sm:$0xff] 0.0
    $region29: #{swinres_forward.1} parent=1 // pred_fallthru
      _
    %v45 = vld [vmem:[#allocation2] sm:$0xff]
    %v46 = vld [vmem:[#allocation2 + $0x8] sm:$0xff]
    %v47 = vld [vmem:[#allocation2 + $0x10] sm:$0xff]
    %v48 = vld [vmem:[#allocation2 + $0x18] sm:$0xff]
    %v49 = vld [vmem:[%s0] sm:$0xff]
    %v50 = vld [vmem:[%s0 + $0x8] sm:$0xff]
    %v51 = vld [vmem:[%s0 + $0x10] sm:$0xff]
    %v52 = vld [vmem:[#allocation3] sm:$0xff]
    %v53 = vld [vmem:[#allocation3 + $0x8] sm:$0xff]
    %v54 = vld [vmem:[#allocation3 + $0x10] sm:$0xff]
    %v55 = vld [vmem:[#allocation3 + $0x18] sm:$0xff]
    %v56 = vld [vmem:[#allocation3 + $0x20] sm:$0xff]
    %v57 = vld [vmem:[#allocation3 + $0x28] sm:$0xff]
    %v58 = vld [vmem:[#allocation3 + $0x30] sm:$0xff]
    %v59 = vld [vmem:[#allocation3 + $0x38] sm:$0xff]
    %v60 = vld [vmem:[#allocation3 + $0x40] sm:$0xff]
    %v61 = vld [vmem:[#allocation3 + $0x48] sm:$0xff]
    %v62 = vld [vmem:[#allocation3 + $0x50] sm:$0xff]
    %v63 = vld [vmem:[#allocation3 + $0x58] sm:$0xff]
    %v64 = vld [vmem:[#allocation3 + $0x60] sm:$0xff]
    %v65 = vld [vmem:[#allocation3 + $0x68] sm:$0xff]
    %v66 = vld [vmem:[#allocation3 + $0x70] sm:$0xff]
    %v67 = vld [vmem:[#allocation3 + $0x78] sm:$0xff]
    %v68 = vld [vmem:[#allocation3 + $0x80] sm:$0xff]
    %v69 = vld [vmem:[#allocation3 + $0x88] sm:$0xff]
    %v70 = vld [vmem:[#allocation3 + $0x90] sm:$0xff]
    %v71 = vld [vmem:[#allocation3 + $0x98] sm:$0xff]
    %v72 = vld [vmem:[#allocation3 + $0xa0] sm:$0xff]
    %v73 = vld [vmem:[#allocation3 + $0xa8] sm:$0xff]
    %v74 = vld [vmem:[#allocation3 + $0xb0] sm:$0xff]
    %v75 = vld [vmem:[#allocation3 + $0xb8] sm:$0xff]
    %v76 = vld [vmem:[#allocation3 + $0xc0] sm:$0xff]
    %v77 = vld [vmem:[#allocation3 + $0xc8] sm:$0xff]
    %v78 = vld [vmem:[#allocation3 + $0xd0] sm:$0xff]
    %v79 = vld [vmem:[#allocation3 + $0xd8] sm:$0xff]
    %v80 = vld [vmem:[#allocation3 + $0xe0] sm:$0xff]
    %v81 = vld [vmem:[#allocation3 + $0xe8] sm:$0xff]
    %v82 = vld [vmem:[#allocation3 + $0xf0] sm:$0xff]
    %v83 = vld [vmem:[#allocation3 + $0xf8] sm:$0xff]
    %v84 = vld [vmem:[#allocation3 + $0x100] sm:$0xff]
    %v85 = vld [vmem:[#allocation3 + $0x108] sm:$0xff]
    %v86 = vld [vmem:[#allocation3 + $0x110] sm:$0xff]
    %v87 = vld [vmem:[#allocation3 + $0x118] sm:$0xff]
    %v88 = vld [vmem:[#allocation3 + $0x120] sm:$0xff]
    %v89 = vld [vmem:[#allocation3 + $0x128] sm:$0xff]
    %v90 = vld [vmem:[#allocation3 + $0x130] sm:$0xff]
    %v91 = vld [vmem:[#allocation3 + $0x138] sm:$0xff]
    %v92 = vld [vmem:[#allocation3 + $0x140] sm:$0xff]
    %v93 = vld [vmem:[#allocation3 + $0x148] sm:$0xff]
    %v94 = vld [vmem:[#allocation3 + $0x150] sm:$0xff]
    %v95 = vld [vmem:[#allocation3 + $0x158] sm:$0xff]
    %v96 = vld [vmem:[#allocation3 + $0x160] sm:$0xff]
    %v97 = vld [vmem:[#allocation3 + $0x168] sm:$0xff]
    %v98 = vld [vmem:[#allocation3 + $0x170] sm:$0xff]
    %v99 = vld [vmem:[#allocation3 + $0x178] sm:$0xff]
    %v100 = vld [vmem:[#allocation3 + $0x180] sm:$0xff]
    %v101 = vld [vmem:[#allocation3 + $0x188] sm:$0xff]
    %v102 = vld [vmem:[#allocation3 + $0x190] sm:$0xff]
    %v103 = vld [vmem:[#allocation3 + $0x198] sm:$0xff]
    %v104 = vld [vmem:[#allocation3 + $0x1a0] sm:$0xff]
    %v105 = vld [vmem:[#allocation3 + $0x1a8] sm:$0xff]
    %v106 = vld [vmem:[#allocation3 + $0x1b0] sm:$0xff]
    %v107 = vld [vmem:[#allocation3 + $0x1b8] sm:$0xff]
    %v108 = vld [vmem:[#allocation3 + $0x1c0] sm:$0xff]
    %v109 = vld [vmem:[#allocation3 + $0x1c8] sm:$0xff]
    %v110 = vld [vmem:[#allocation3 + $0x1d0] sm:$0xff]
    %v111 = vld [vmem:[#allocation3 + $0x1d8] sm:$0xff]
    %v112 = vld [vmem:[#allocation3 + $0x1e0] sm:$0xff]
    %v113 = vld [vmem:[#allocation3 + $0x1e8] sm:$0xff]
    %v114 = vld [vmem:[#allocation3 + $0x1f0] sm:$0xff]
    %v115 = vld [vmem:[#allocation3 + $0x1f8] sm:$0xff]
    %v116 = vld [vmem:[#allocation3 + $0x200] sm:$0xff]
    %v117 = vld [vmem:[#allocation3 + $0x208] sm:$0xff]
    %v118 = vld [vmem:[#allocation3 + $0x210] sm:$0xff]
    %v119 = vld [vmem:[#allocation3 + $0x218] sm:$0xff]
    %v120 = vld [vmem:[#allocation3 + $0x220] sm:$0xff]
    %v121 = vld [vmem:[#allocation3 + $0x228] sm:$0xff]
    %v122 = vld [vmem:[#allocation3 + $0x230] sm:$0xff]
    %v123 = vld [vmem:[#allocation3 + $0x238] sm:$0xff]
    %v124 = vld [vmem:[#allocation3 + $0x240] sm:$0xff]
    %v125 = vld [vmem:[#allocation3 + $0x248] sm:$0xff]
    %v126 = vld [vmem:[#allocation3 + $0x250] sm:$0xff]
    %v127 = vld [vmem:[#allocation3 + $0x258] sm:$0xff]
    %v128 = vld [vmem:[#allocation3 + $0x260] sm:$0xff]
    %v129 = vld [vmem:[#allocation3 + $0x268] sm:$0xff]
    %v130 = vld [vmem:[#allocation3 + $0x270] sm:$0xff]
    %v131 = vld [vmem:[#allocation3 + $0x278] sm:$0xff]
    %v132 = vld [vmem:[#allocation3 + $0x280] sm:$0xff]
    %v133 = vld [vmem:[#allocation3 + $0x288] sm:$0xff]
    %v134 = vld [vmem:[#allocation3 + $0x290] sm:$0xff]
    %v135 = vld [vmem:[#allocation3 + $0x298] sm:$0xff]
    %v136 = vld [vmem:[#allocation3 + $0x2a0] sm:$0xff]
    %v137 = vld [vmem:[#allocation3 + $0x2a8] sm:$0xff]
    %v138 = vld [vmem:[#allocation3 + $0x2b0] sm:$0xff]
    %v139 = vld [vmem:[#allocation3 + $0x2b8] sm:$0xff]
    %v140 = vld [vmem:[#allocation3 + $0x2c0] sm:$0xff]
    %v141 = vld [vmem:[#allocation3 + $0x2c8] sm:$0xff]
    %v142 = vld [vmem:[#allocation3 + $0x2d0] sm:$0xff]
    %v143 = vld [vmem:[#allocation3 + $0x2d8] sm:$0xff]
    %v144 = vld [vmem:[#allocation3 + $0x2e0] sm:$0xff]
    %v145 = vld [vmem:[#allocation3 + $0x2e8] sm:$0xff]
    %v146 = vld [vmem:[#allocation3 + $0x2f0] sm:$0xff]
    %v147 = vld [vmem:[#allocation3 + $0x2f8] sm:$0xff]
    %v148 = vld [vmem:[#allocation3 + $0x300] sm:$0xff]
    %v149 = vld [vmem:[#allocation3 + $0x308] sm:$0xff]
    %v150 = vld [vmem:[#allocation3 + $0x310] sm:$0xff]
    %v151 = vld [vmem:[#allocation3 + $0x318] sm:$0xff]
    %v152 = vld [vmem:[#allocation3 + $0x320] sm:$0xff]
    %v153 = vld [vmem:[#allocation3 + $0x328] sm:$0xff]
    %v154 = vld [vmem:[#allocation3 + $0x330] sm:$0xff]
    %v155 = vld [vmem:[#allocation3 + $0x338] sm:$0xff]
    %v156 = vld [vmem:[#allocation3 + $0x340] sm:$0xff]
    %v157 = vld [vmem:[#allocation3 + $0x348] sm:$0xff]
    %v158 = vld [vmem:[#allocation3 + $0x350] sm:$0xff]
    %v159 = vld [vmem:[#allocation3 + $0x358] sm:$0xff]
    %v160 = vld [vmem:[#allocation3 + $0x360] sm:$0xff]
    %v161 = vld [vmem:[#allocation3 + $0x368] sm:$0xff]
    %v162 = vld [vmem:[#allocation3 + $0x370] sm:$0xff]
    %v163 = vld [vmem:[#allocation3 + $0x378] sm:$0xff]
    %v164 = vld [vmem:[#allocation3 + $0x380] sm:$0xff]
    %v165 = vld [vmem:[#allocation3 + $0x388] sm:$0xff]
    %v166 = vld [vmem:[#allocation3 + $0x390] sm:$0xff]
    %v167 = vld [vmem:[#allocation3 + $0x398] sm:$0xff]
    %v168 = vld [vmem:[#allocation3 + $0x3a0] sm:$0xff]
    %v169 = vld [vmem:[#allocation3 + $0x3a8] sm:$0xff]
    %v170 = vld [vmem:[#allocation3 + $0x3b0] sm:$0xff]
    %v171 = vld [vmem:[#allocation3 + $0x3b8] sm:$0xff]
    %v172 = vld [vmem:[#allocation3 + $0x3c0] sm:$0xff]
    %v173 = vld [vmem:[#allocation3 + $0x3c8] sm:$0xff]
    %v174 = vld [vmem:[#allocation3 + $0x3d0] sm:$0xff]
    %v175 = vld [vmem:[#allocation3 + $0x3d8] sm:$0xff]
    %v176 = vld [vmem:[#allocation3 + $0x3e0] sm:$0xff]
    %v177 = vld [vmem:[#allocation3 + $0x3e8] sm:$0xff]
    %v178 = vld [vmem:[#allocation3 + $0x3f0] sm:$0xff]
    %v179 = vld [vmem:[#allocation3 + $0x3f8] sm:$0xff]
    %v180 = vld [vmem:[#allocation3 + $0x400] sm:$0xff]
    %v181 = vld [vmem:[#allocation3 + $0x408] sm:$0xff]
    %v182 = vld [vmem:[#allocation3 + $0x410] sm:$0xff]
    %v183 = vld [vmem:[#allocation3 + $0x418] sm:$0xff]
    %v184 = vld [vmem:[#allocation3 + $0x420] sm:$0xff]
    %v185 = vld [vmem:[#allocation3 + $0x428] sm:$0xff]
    %v186 = vld [vmem:[#allocation3 + $0x430] sm:$0xff]
    %v187 = vld [vmem:[#allocation3 + $0x438] sm:$0xff]
    %v188 = vld [vmem:[#allocation3 + $0x440] sm:$0xff]
    %v189 = vld [vmem:[#allocation3 + $0x448] sm:$0xff]
    %v190 = vld [vmem:[#allocation3 + $0x450] sm:$0xff]
    %v191 = vld [vmem:[#allocation3 + $0x458] sm:$0xff]
    %v192 = vld [vmem:[#allocation3 + $0x460] sm:$0xff]
    %v193 = vld [vmem:[#allocation3 + $0x468] sm:$0xff]
    %v194 = vld [vmem:[#allocation3 + $0x470] sm:$0xff]
    %v195 = vld [vmem:[#allocation3 + $0x478] sm:$0xff]
    %v196 = vld [vmem:[#allocation3 + $0x480] sm:$0xff]
    %v197 = vld [vmem:[#allocation3 + $0x488] sm:$0xff]
    %v198 = vld [vmem:[#allocation3 + $0x490] sm:$0xff]
    %v199 = vld [vmem:[#allocation3 + $0x498] sm:$0xff]
    %v200 = vld [vmem:[#allocation3 + $0x4a0] sm:$0xff]
    %v201 = vld [vmem:[#allocation3 + $0x4a8] sm:$0xff]
    %v202 = vld [vmem:[#allocation3 + $0x4b0] sm:$0xff]
    %v203 = vld [vmem:[#allocation3 + $0x4b8] sm:$0xff]
    %v204 = vld [vmem:[#allocation3 + $0x4c0] sm:$0xff]
    %v205 = vld [vmem:[#allocation3 + $0x4c8] sm:$0xff]
    %v206 = vld [vmem:[#allocation3 + $0x4d0] sm:$0xff]
    %v207 = vld [vmem:[#allocation3 + $0x4d8] sm:$0xff]
    %v208 = vld [vmem:[#allocation3 + $0x4e0] sm:$0xff]
    %v209 = vld [vmem:[#allocation3 + $0x4e8] sm:$0xff]
    %v210 = vld [vmem:[#allocation3 + $0x4f0] sm:$0xff]
    %v211 = vld [vmem:[#allocation3 + $0x4f8] sm:$0xff]
    %v212 = vld [vmem:[#allocation3 + $0x500] sm:$0xff]
    %v213 = vld [vmem:[#allocation3 + $0x508] sm:$0xff]
    %v214 = vld [vmem:[#allocation3 + $0x510] sm:$0xff]
    %v215 = vld [vmem:[#allocation3 + $0x518] sm:$0xff]
    %v216 = vld [vmem:[#allocation3 + $0x520] sm:$0xff]
    %v217 = vld [vmem:[#allocation3 + $0x528] sm:$0xff]
    %v218 = vld [vmem:[#allocation3 + $0x530] sm:$0xff]
    %v219 = vld [vmem:[#allocation3 + $0x538] sm:$0xff]
    %v220 = vld [vmem:[#allocation3 + $0x540] sm:$0xff]
    %v221 = vld [vmem:[#allocation3 + $0x548] sm:$0xff]
    %v222 = vld [vmem:[#allocation3 + $0x550] sm:$0xff]
    %v223 = vld [vmem:[#allocation3 + $0x558] sm:$0xff]
    %v224 = vld [vmem:[#allocation3 + $0x560] sm:$0xff]
    %v225 = vld [vmem:[#allocation3 + $0x568] sm:$0xff]
    %v226 = vld [vmem:[#allocation3 + $0x570] sm:$0xff]
    %v227 = vld [vmem:[#allocation3 + $0x578] sm:$0xff]
    %v228 = vld [vmem:[#allocation3 + $0x580] sm:$0xff]
    %v229 = vld [vmem:[#allocation3 + $0x588] sm:$0xff]
    %v230 = vld [vmem:[#allocation3 + $0x590] sm:$0xff]
    %v231 = vld [vmem:[#allocation3 + $0x598] sm:$0xff]
    %v232 = vld [vmem:[#allocation3 + $0x5a0] sm:$0xff]
    %v233 = vld [vmem:[#allocation3 + $0x5a8] sm:$0xff]
    %v234 = vld [vmem:[#allocation3 + $0x5b0] sm:$0xff]
    %v235 = vld [vmem:[#allocation3 + $0x5b8] sm:$0xff]
    %v236 = vld [vmem:[#allocation3 + $0x5c0] sm:$0xff]
    %v237 = vld [vmem:[#allocation3 + $0x5c8] sm:$0xff]
    %v238 = vld [vmem:[#allocation3 + $0x5d0] sm:$0xff]
    %v239 = vld [vmem:[#allocation3 + $0x5d8] sm:$0xff]
    %v240 = vld [vmem:[#allocation3 + $0x5e0] sm:$0xff]
    %v241 = vld [vmem:[#allocation3 + $0x5e8] sm:$0xff]
    %v242 = vld [vmem:[#allocation3 + $0x5f0] sm:$0xff]
    %v243 = vld [vmem:[#allocation3 + $0x5f8] sm:$0xff]
    %v247 = vunpack.c.l.b16 %v49
    %v248 = vunpack.c.h.b16 %v49
    %v249 = vunpack.c.l.b16 %v50
    %v250 = vunpack.c.h.b16 %v50
    %v251 = vunpack.c.l.b16 %v51
    %v252 = vunpack.c.h.b16 %v51
    %v253 = vpack.c.b16 %v247, %v247
    %v254 = vpack.c.b16 %v248, %v248
    %v255 = vpack.c.b16 %v249, %v249
    %v256 = vpack.c.b16 %v250, %v250
    %v257 = vpack.c.b16 %v251, %v251
    %v258 = vpack.c.b16 %v252, %v252
    %v457 = vunpack.c.l.b16 %v52
    %v458 = vunpack.c.h.b16 %v52
    %v459 = vunpack.c.l.b16 %v53
    %v460 = vunpack.c.h.b16 %v53
    %v461 = vunpack.c.l.b16 %v54
    %v462 = vunpack.c.h.b16 %v54
    %v463 = vunpack.c.l.b16 %v55
    %v464 = vunpack.c.h.b16 %v55
    %v465 = vunpack.c.l.b16 %v56
    %v466 = vunpack.c.h.b16 %v56
    %v467 = vunpack.c.l.b16 %v57
    %v468 = vunpack.c.h.b16 %v57
    %v469 = vunpack.c.l.b16 %v58
    %v470 = vunpack.c.h.b16 %v58
    %v471 = vunpack.c.l.b16 %v59
    %v472 = vunpack.c.h.b16 %v59
    %v473 = vunpack.c.l.b16 %v60
    %v474 = vunpack.c.h.b16 %v60
    %v475 = vunpack.c.l.b16 %v61
    %v476 = vunpack.c.h.b16 %v61
    %v477 = vunpack.c.l.b16 %v62
    %v478 = vunpack.c.h.b16 %v62
    %v479 = vunpack.c.l.b16 %v63
    %v480 = vunpack.c.h.b16 %v63
    %v481 = vunpack.c.l.b16 %v64
    %v482 = vunpack.c.h.b16 %v64
    %v483 = vunpack.c.l.b16 %v65
    %v484 = vunpack.c.h.b16 %v65
    %v485 = vunpack.c.l.b16 %v66
    %v486 = vunpack.c.h.b16 %v66
    %v487 = vunpack.c.l.b16 %v67
    %v488 = vunpack.c.h.b16 %v67
    %v489 = vunpack.c.l.b16 %v68
    %v490 = vunpack.c.h.b16 %v68
    %v491 = vunpack.c.l.b16 %v69
    %v492 = vunpack.c.h.b16 %v69
    %v493 = vunpack.c.l.b16 %v70
    %v494 = vunpack.c.h.b16 %v70
    %v495 = vunpack.c.l.b16 %v71
    %v496 = vunpack.c.h.b16 %v71
    %v497 = vunpack.c.l.b16 %v72
    %v498 = vunpack.c.h.b16 %v72
    %v499 = vunpack.c.l.b16 %v73
    %v500 = vunpack.c.h.b16 %v73
    %v501 = vunpack.c.l.b16 %v74
    %v502 = vunpack.c.h.b16 %v74
    %v503 = vunpack.c.l.b16 %v75
    %v504 = vunpack.c.h.b16 %v75
    %v505 = vunpack.c.l.b16 %v76
    %v506 = vunpack.c.h.b16 %v76
    %v507 = vunpack.c.l.b16 %v77
    %v508 = vunpack.c.h.b16 %v77
    %v509 = vunpack.c.l.b16 %v78
    %v510 = vunpack.c.h.b16 %v78
    %v511 = vunpack.c.l.b16 %v79
    %v512 = vunpack.c.h.b16 %v79
    %v513 = vunpack.c.l.b16 %v80
    %v514 = vunpack.c.h.b16 %v80
    %v515 = vunpack.c.l.b16 %v81
    %v516 = vunpack.c.h.b16 %v81
    %v517 = vunpack.c.l.b16 %v82
    %v518 = vunpack.c.h.b16 %v82
    %v519 = vunpack.c.l.b16 %v83
    %v520 = vunpack.c.h.b16 %v83
    %v521 = vunpack.c.l.b16 %v84
    %v522 = vunpack.c.h.b16 %v84
    %v523 = vunpack.c.l.b16 %v85
    %v524 = vunpack.c.h.b16 %v85
    %v525 = vunpack.c.l.b16 %v86
    %v526 = vunpack.c.h.b16 %v86
    %v527 = vunpack.c.l.b16 %v87
    %v528 = vunpack.c.h.b16 %v87
    %v529 = vunpack.c.l.b16 %v88
    %v530 = vunpack.c.h.b16 %v88
    %v531 = vunpack.c.l.b16 %v89
    %v532 = vunpack.c.h.b16 %v89
    %v533 = vunpack.c.l.b16 %v90
    %v534 = vunpack.c.h.b16 %v90
    %v535 = vunpack.c.l.b16 %v91
    %v536 = vunpack.c.h.b16 %v91
    %v537 = vunpack.c.l.b16 %v92
    %v538 = vunpack.c.h.b16 %v92
    %v539 = vunpack.c.l.b16 %v93
    %v540 = vunpack.c.h.b16 %v93
    %v541 = vunpack.c.l.b16 %v94
    %v542 = vunpack.c.h.b16 %v94
    %v543 = vunpack.c.l.b16 %v95
    %v544 = vunpack.c.h.b16 %v95
    %v545 = vunpack.c.l.b16 %v96
    %v546 = vunpack.c.h.b16 %v96
    %v547 = vunpack.c.l.b16 %v97
    %v548 = vunpack.c.h.b16 %v97
    %v549 = vunpack.c.l.b16 %v98
    %v550 = vunpack.c.h.b16 %v98
    %v551 = vunpack.c.l.b16 %v99
    %v552 = vunpack.c.h.b16 %v99
    %v553 = vunpack.c.l.b16 %v100
    %v554 = vunpack.c.h.b16 %v100
    %v555 = vunpack.c.l.b16 %v101
    %v556 = vunpack.c.h.b16 %v101
    %v557 = vunpack.c.l.b16 %v102
    %v558 = vunpack.c.h.b16 %v102
    %v559 = vunpack.c.l.b16 %v103
    %v560 = vunpack.c.h.b16 %v103
    %v561 = vunpack.c.l.b16 %v104
    %v562 = vunpack.c.h.b16 %v104
    %v563 = vunpack.c.l.b16 %v105
    %v564 = vunpack.c.h.b16 %v105
    %v565 = vunpack.c.l.b16 %v106
    %v566 = vunpack.c.h.b16 %v106
    %v567 = vunpack.c.l.b16 %v107
    %v568 = vunpack.c.h.b16 %v107
    %v569 = vunpack.c.l.b16 %v108
    %v570 = vunpack.c.h.b16 %v108
    %v571 = vunpack.c.l.b16 %v109
    %v572 = vunpack.c.h.b16 %v109
    %v573 = vunpack.c.l.b16 %v110
    %v574 = vunpack.c.h.b16 %v110
    %v575 = vunpack.c.l.b16 %v111
    %v576 = vunpack.c.h.b16 %v111
    %v577 = vunpack.c.l.b16 %v112
    %v578 = vunpack.c.h.b16 %v112
    %v579 = vunpack.c.l.b16 %v113
    %v580 = vunpack.c.h.b16 %v113
    %v581 = vunpack.c.l.b16 %v114
    %v582 = vunpack.c.h.b16 %v114
    %v583 = vunpack.c.l.b16 %v115
    %v584 = vunpack.c.h.b16 %v115
    %v585 = vunpack.c.l.b16 %v116
    %v586 = vunpack.c.h.b16 %v116
    %v587 = vunpack.c.l.b16 %v117
    %v588 = vunpack.c.h.b16 %v117
    %v589 = vunpack.c.l.b16 %v118
    %v590 = vunpack.c.h.b16 %v118
    %v591 = vunpack.c.l.b16 %v119
    %v592 = vunpack.c.h.b16 %v119
    %v593 = vunpack.c.l.b16 %v120
    %v594 = vunpack.c.h.b16 %v120
    %v595 = vunpack.c.l.b16 %v121
    %v596 = vunpack.c.h.b16 %v121
    %v597 = vunpack.c.l.b16 %v122
    %v598 = vunpack.c.h.b16 %v122
    %v599 = vunpack.c.l.b16 %v123
    %v600 = vunpack.c.h.b16 %v123
    %v601 = vunpack.c.l.b16 %v124
    %v602 = vunpack.c.h.b16 %v124
    %v603 = vunpack.c.l.b16 %v125
    %v604 = vunpack.c.h.b16 %v125
    %v605 = vunpack.c.l.b16 %v126
    %v606 = vunpack.c.h.b16 %v126
    %v607 = vunpack.c.l.b16 %v127
    %v608 = vunpack.c.h.b16 %v127
    %v609 = vunpack.c.l.b16 %v128
    %v610 = vunpack.c.h.b16 %v128
    %v611 = vunpack.c.l.b16 %v129
    %v612 = vunpack.c.h.b16 %v129
    %v613 = vunpack.c.l.b16 %v130
    %v614 = vunpack.c.h.b16 %v130
    %v615 = vunpack.c.l.b16 %v131
    %v616 = vunpack.c.h.b16 %v131
    %v617 = vunpack.c.l.b16 %v132
    %v618 = vunpack.c.h.b16 %v132
    %v619 = vunpack.c.l.b16 %v133
    %v620 = vunpack.c.h.b16 %v133
    %v621 = vunpack.c.l.b16 %v134
    %v622 = vunpack.c.h.b16 %v134
    %v623 = vunpack.c.l.b16 %v135
    %v624 = vunpack.c.h.b16 %v135
    %v625 = vunpack.c.l.b16 %v136
    %v626 = vunpack.c.h.b16 %v136
    %v627 = vunpack.c.l.b16 %v137
    %v628 = vunpack.c.h.b16 %v137
    %v629 = vunpack.c.l.b16 %v138
    %v630 = vunpack.c.h.b16 %v138
    %v631 = vunpack.c.l.b16 %v139
    %v632 = vunpack.c.h.b16 %v139
    %v633 = vunpack.c.l.b16 %v140
    %v634 = vunpack.c.h.b16 %v140
    %v635 = vunpack.c.l.b16 %v141
    %v636 = vunpack.c.h.b16 %v141
    %v637 = vunpack.c.l.b16 %v142
    %v638 = vunpack.c.h.b16 %v142
    %v639 = vunpack.c.l.b16 %v143
    %v640 = vunpack.c.h.b16 %v143
    %v641 = vunpack.c.l.b16 %v144
    %v642 = vunpack.c.h.b16 %v144
    %v643 = vunpack.c.l.b16 %v145
    %v644 = vunpack.c.h.b16 %v145
    %v645 = vunpack.c.l.b16 %v146
    %v646 = vunpack.c.h.b16 %v146
    %v647 = vunpack.c.l.b16 %v147
    %v648 = vunpack.c.h.b16 %v147
    %v649 = vunpack.c.l.b16 %v148
    %v650 = vunpack.c.h.b16 %v148
    %v651 = vunpack.c.l.b16 %v149
    %v652 = vunpack.c.h.b16 %v149
    %v653 = vunpack.c.l.b16 %v150
    %v654 = vunpack.c.h.b16 %v150
    %v655 = vunpack.c.l.b16 %v151
    %v656 = vunpack.c.h.b16 %v151
    %v657 = vunpack.c.l.b16 %v152
    %v658 = vunpack.c.h.b16 %v152
    %v659 = vunpack.c.l.b16 %v153
    %v660 = vunpack.c.h.b16 %v153
    %v661 = vunpack.c.l.b16 %v154
    %v662 = vunpack.c.h.b16 %v154
    %v663 = vunpack.c.l.b16 %v155
    %v664 = vunpack.c.h.b16 %v155
    %v665 = vunpack.c.l.b16 %v156
    %v666 = vunpack.c.h.b16 %v156
    %v667 = vunpack.c.l.b16 %v157
    %v668 = vunpack.c.h.b16 %v157
    %v669 = vunpack.c.l.b16 %v158
    %v670 = vunpack.c.h.b16 %v158
    %v671 = vunpack.c.l.b16 %v159
    %v672 = vunpack.c.h.b16 %v159
    %v673 = vunpack.c.l.b16 %v160
    %v674 = vunpack.c.h.b16 %v160
    %v675 = vunpack.c.l.b16 %v161
    %v676 = vunpack.c.h.b16 %v161
    %v677 = vunpack.c.l.b16 %v162
    %v678 = vunpack.c.h.b16 %v162
    %v679 = vunpack.c.l.b16 %v163
    %v680 = vunpack.c.h.b16 %v163
    %v681 = vunpack.c.l.b16 %v164
    %v682 = vunpack.c.h.b16 %v164
    %v683 = vunpack.c.l.b16 %v165
    %v684 = vunpack.c.h.b16 %v165
    %v685 = vunpack.c.l.b16 %v166
    %v686 = vunpack.c.h.b16 %v166
    %v687 = vunpack.c.l.b16 %v167
    %v688 = vunpack.c.h.b16 %v167
    %v689 = vunpack.c.l.b16 %v168
    %v690 = vunpack.c.h.b16 %v168
    %v691 = vunpack.c.l.b16 %v169
    %v692 = vunpack.c.h.b16 %v169
    %v693 = vunpack.c.l.b16 %v170
    %v694 = vunpack.c.h.b16 %v170
    %v695 = vunpack.c.l.b16 %v171
    %v696 = vunpack.c.h.b16 %v171
    %v697 = vunpack.c.l.b16 %v172
    %v698 = vunpack.c.h.b16 %v172
    %v699 = vunpack.c.l.b16 %v173
    %v700 = vunpack.c.h.b16 %v173
    %v701 = vunpack.c.l.b16 %v174
    %v702 = vunpack.c.h.b16 %v174
    %v703 = vunpack.c.l.b16 %v175
    %v704 = vunpack.c.h.b16 %v175
    %v705 = vunpack.c.l.b16 %v176
    %v706 = vunpack.c.h.b16 %v176
    %v707 = vunpack.c.l.b16 %v177
    %v708 = vunpack.c.h.b16 %v177
    %v709 = vunpack.c.l.b16 %v178
    %v710 = vunpack.c.h.b16 %v178
    %v711 = vunpack.c.l.b16 %v179
    %v712 = vunpack.c.h.b16 %v179
    %v713 = vunpack.c.l.b16 %v180
    %v714 = vunpack.c.h.b16 %v180
    %v715 = vunpack.c.l.b16 %v181
    %v716 = vunpack.c.h.b16 %v181
    %v717 = vunpack.c.l.b16 %v182
    %v718 = vunpack.c.h.b16 %v182
    %v719 = vunpack.c.l.b16 %v183
    %v720 = vunpack.c.h.b16 %v183
    %v721 = vunpack.c.l.b16 %v184
    %v722 = vunpack.c.h.b16 %v184
    %v723 = vunpack.c.l.b16 %v185
    %v724 = vunpack.c.h.b16 %v185
    %v725 = vunpack.c.l.b16 %v186
    %v726 = vunpack.c.h.b16 %v186
    %v727 = vunpack.c.l.b16 %v187
    %v728 = vunpack.c.h.b16 %v187
    %v729 = vunpack.c.l.b16 %v188
    %v730 = vunpack.c.h.b16 %v188
    %v731 = vunpack.c.l.b16 %v189
    %v732 = vunpack.c.h.b16 %v189
    %v733 = vunpack.c.l.b16 %v190
    %v734 = vunpack.c.h.b16 %v190
    %v735 = vunpack.c.l.b16 %v191
    %v736 = vunpack.c.h.b16 %v191
    %v737 = vunpack.c.l.b16 %v192
    %v738 = vunpack.c.h.b16 %v192
    %v739 = vunpack.c.l.b16 %v193
    %v740 = vunpack.c.h.b16 %v193
    %v741 = vunpack.c.l.b16 %v194
    %v742 = vunpack.c.h.b16 %v194
    %v743 = vunpack.c.l.b16 %v195
    %v744 = vunpack.c.h.b16 %v195
    %v745 = vunpack.c.l.b16 %v196
    %v746 = vunpack.c.h.b16 %v196
    %v747 = vunpack.c.l.b16 %v197
    %v748 = vunpack.c.h.b16 %v197
    %v749 = vunpack.c.l.b16 %v198
    %v750 = vunpack.c.h.b16 %v198
    %v751 = vunpack.c.l.b16 %v199
    %v752 = vunpack.c.h.b16 %v199
    %v753 = vunpack.c.l.b16 %v200
    %v754 = vunpack.c.h.b16 %v200
    %v755 = vunpack.c.l.b16 %v201
    %v756 = vunpack.c.h.b16 %v201
    %v757 = vunpack.c.l.b16 %v202
    %v758 = vunpack.c.h.b16 %v202
    %v759 = vunpack.c.l.b16 %v203
    %v760 = vunpack.c.h.b16 %v203
    %v761 = vunpack.c.l.b16 %v204
    %v762 = vunpack.c.h.b16 %v204
    %v763 = vunpack.c.l.b16 %v205
    %v764 = vunpack.c.h.b16 %v205
    %v765 = vunpack.c.l.b16 %v206
    %v766 = vunpack.c.h.b16 %v206
    %v767 = vunpack.c.l.b16 %v207
    %v768 = vunpack.c.h.b16 %v207
    %v769 = vunpack.c.l.b16 %v208
    %v770 = vunpack.c.h.b16 %v208
    %v771 = vunpack.c.l.b16 %v209
    %v772 = vunpack.c.h.b16 %v209
    %v773 = vunpack.c.l.b16 %v210
    %v774 = vunpack.c.h.b16 %v210
    %v775 = vunpack.c.l.b16 %v211
    %v776 = vunpack.c.h.b16 %v211
    %v777 = vunpack.c.l.b16 %v212
    %v778 = vunpack.c.h.b16 %v212
    %v779 = vunpack.c.l.b16 %v213
    %v780 = vunpack.c.h.b16 %v213
    %v781 = vunpack.c.l.b16 %v214
    %v782 = vunpack.c.h.b16 %v214
    %v783 = vunpack.c.l.b16 %v215
    %v784 = vunpack.c.h.b16 %v215
    %v785 = vunpack.c.l.b16 %v216
    %v786 = vunpack.c.h.b16 %v216
    %v787 = vunpack.c.l.b16 %v217
    %v788 = vunpack.c.h.b16 %v217
    %v789 = vunpack.c.l.b16 %v218
    %v790 = vunpack.c.h.b16 %v218
    %v791 = vunpack.c.l.b16 %v219
    %v792 = vunpack.c.h.b16 %v219
    %v793 = vunpack.c.l.b16 %v220
    %v794 = vunpack.c.h.b16 %v220
    %v795 = vunpack.c.l.b16 %v221
    %v796 = vunpack.c.h.b16 %v221
    %v797 = vunpack.c.l.b16 %v222
    %v798 = vunpack.c.h.b16 %v222
    %v799 = vunpack.c.l.b16 %v223
    %v800 = vunpack.c.h.b16 %v223
    %v801 = vunpack.c.l.b16 %v224
    %v802 = vunpack.c.h.b16 %v224
    %v803 = vunpack.c.l.b16 %v225
    %v804 = vunpack.c.h.b16 %v225
    %v805 = vunpack.c.l.b16 %v226
    %v806 = vunpack.c.h.b16 %v226
    %v807 = vunpack.c.l.b16 %v227
    %v808 = vunpack.c.h.b16 %v227
    %v809 = vunpack.c.l.b16 %v228
    %v810 = vunpack.c.h.b16 %v228
    %v811 = vunpack.c.l.b16 %v229
    %v812 = vunpack.c.h.b16 %v229
    %v813 = vunpack.c.l.b16 %v230
    %v814 = vunpack.c.h.b16 %v230
    %v815 = vunpack.c.l.b16 %v231
    %v816 = vunpack.c.h.b16 %v231
    %v817 = vunpack.c.l.b16 %v232
    %v818 = vunpack.c.h.b16 %v232
    %v819 = vunpack.c.l.b16 %v233
    %v820 = vunpack.c.h.b16 %v233
    %v821 = vunpack.c.l.b16 %v234
    %v822 = vunpack.c.h.b16 %v234
    %v823 = vunpack.c.l.b16 %v235
    %v824 = vunpack.c.h.b16 %v235
    %v825 = vunpack.c.l.b16 %v236
    %v826 = vunpack.c.h.b16 %v236
    %v827 = vunpack.c.l.b16 %v237
    %v828 = vunpack.c.h.b16 %v237
    %v829 = vunpack.c.l.b16 %v238
    %v830 = vunpack.c.h.b16 %v238
    %v831 = vunpack.c.l.b16 %v239
    %v832 = vunpack.c.h.b16 %v239
    %v833 = vunpack.c.l.b16 %v240
    %v834 = vunpack.c.h.b16 %v240
    %v835 = vunpack.c.l.b16 %v241
    %v836 = vunpack.c.h.b16 %v241
    %v837 = vunpack.c.l.b16 %v242
    %v838 = vunpack.c.h.b16 %v242
    %v839 = vunpack.c.l.b16 %v243
    %v840 = vunpack.c.h.b16 %v243
    %v841 = vpack.c.b16 %v461, %v457
    %v842 = vpack.c.b16 %v462, %v458
    %v843 = vpack.c.b16 %v463, %v459
    %v844 = vpack.c.b16 %v464, %v460
    %v845 = vpack.c.b16 %v469, %v465
    %v846 = vpack.c.b16 %v470, %v466
    %v847 = vpack.c.b16 %v471, %v467
    %v848 = vpack.c.b16 %v472, %v468
    %v849 = vpack.c.b16 %v477, %v473
    %v850 = vpack.c.b16 %v478, %v474
    %v851 = vpack.c.b16 %v479, %v475
    %v852 = vpack.c.b16 %v480, %v476
    %v853 = vpack.c.b16 %v485, %v481
    %v854 = vpack.c.b16 %v486, %v482
    %v855 = vpack.c.b16 %v487, %v483
    %v856 = vpack.c.b16 %v488, %v484
    %v857 = vpack.c.b16 %v493, %v489
    %v858 = vpack.c.b16 %v494, %v490
    %v859 = vpack.c.b16 %v495, %v491
    %v860 = vpack.c.b16 %v496, %v492
    %v861 = vpack.c.b16 %v501, %v497
    %v862 = vpack.c.b16 %v502, %v498
    %v863 = vpack.c.b16 %v503, %v499
    %v864 = vpack.c.b16 %v504, %v500
    %v865 = vpack.c.b16 %v509, %v505
    %v866 = vpack.c.b16 %v510, %v506
    %v867 = vpack.c.b16 %v511, %v507
    %v868 = vpack.c.b16 %v512, %v508
    %v869 = vpack.c.b16 %v517, %v513
    %v870 = vpack.c.b16 %v518, %v514
    %v871 = vpack.c.b16 %v519, %v515
    %v872 = vpack.c.b16 %v520, %v516
    %v873 = vpack.c.b16 %v525, %v521
    %v874 = vpack.c.b16 %v526, %v522
    %v875 = vpack.c.b16 %v527, %v523
    %v876 = vpack.c.b16 %v528, %v524
    %v877 = vpack.c.b16 %v533, %v529
    %v878 = vpack.c.b16 %v534, %v530
    %v879 = vpack.c.b16 %v535, %v531
    %v880 = vpack.c.b16 %v536, %v532
    %v881 = vpack.c.b16 %v541, %v537
    %v882 = vpack.c.b16 %v542, %v538
    %v883 = vpack.c.b16 %v543, %v539
    %v884 = vpack.c.b16 %v544, %v540
    %v885 = vpack.c.b16 %v549, %v545
    %v886 = vpack.c.b16 %v550, %v546
    %v887 = vpack.c.b16 %v551, %v547
    %v888 = vpack.c.b16 %v552, %v548
    %v889 = vpack.c.b16 %v557, %v553
    %v890 = vpack.c.b16 %v558, %v554
    %v891 = vpack.c.b16 %v559, %v555
    %v892 = vpack.c.b16 %v560, %v556
    %v893 = vpack.c.b16 %v565, %v561
    %v894 = vpack.c.b16 %v566, %v562
    %v895 = vpack.c.b16 %v567, %v563
    %v896 = vpack.c.b16 %v568, %v564
    %v897 = vpack.c.b16 %v573, %v569
    %v898 = vpack.c.b16 %v574, %v570
    %v899 = vpack.c.b16 %v575, %v571
    %v900 = vpack.c.b16 %v576, %v572
    %v901 = vpack.c.b16 %v581, %v577
    %v902 = vpack.c.b16 %v582, %v578
    %v903 = vpack.c.b16 %v583, %v579
    %v904 = vpack.c.b16 %v584, %v580
    %v905 = vpack.c.b16 %v589, %v585
    %v906 = vpack.c.b16 %v590, %v586
    %v907 = vpack.c.b16 %v591, %v587
    %v908 = vpack.c.b16 %v592, %v588
    %v909 = vpack.c.b16 %v597, %v593
    %v910 = vpack.c.b16 %v598, %v594
    %v911 = vpack.c.b16 %v599, %v595
    %v912 = vpack.c.b16 %v600, %v596
    %v913 = vpack.c.b16 %v605, %v601
    %v914 = vpack.c.b16 %v606, %v602
    %v915 = vpack.c.b16 %v607, %v603
    %v916 = vpack.c.b16 %v608, %v604
    %v917 = vpack.c.b16 %v613, %v609
    %v918 = vpack.c.b16 %v614, %v610
    %v919 = vpack.c.b16 %v615, %v611
    %v920 = vpack.c.b16 %v616, %v612
    %v921 = vpack.c.b16 %v621, %v617
    %v922 = vpack.c.b16 %v622, %v618
    %v923 = vpack.c.b16 %v623, %v619
    %v924 = vpack.c.b16 %v624, %v620
    %v925 = vpack.c.b16 %v629, %v625
    %v926 = vpack.c.b16 %v630, %v626
    %v927 = vpack.c.b16 %v631, %v627
    %v928 = vpack.c.b16 %v632, %v628
    %v929 = vpack.c.b16 %v637, %v633
    %v930 = vpack.c.b16 %v638, %v634
    %v931 = vpack.c.b16 %v639, %v635
    %v932 = vpack.c.b16 %v640, %v636
    %v933 = vpack.c.b16 %v645, %v641
    %v934 = vpack.c.b16 %v646, %v642
    %v935 = vpack.c.b16 %v647, %v643
    %v936 = vpack.c.b16 %v648, %v644
    %v937 = vpack.c.b16 %v653, %v649
    %v938 = vpack.c.b16 %v654, %v650
    %v939 = vpack.c.b16 %v655, %v651
    %v940 = vpack.c.b16 %v656, %v652
    %v941 = vpack.c.b16 %v661, %v657
    %v942 = vpack.c.b16 %v662, %v658
    %v943 = vpack.c.b16 %v663, %v659
    %v944 = vpack.c.b16 %v664, %v660
    %v945 = vpack.c.b16 %v669, %v665
    %v946 = vpack.c.b16 %v670, %v666
    %v947 = vpack.c.b16 %v671, %v667
    %v948 = vpack.c.b16 %v672, %v668
    %v949 = vpack.c.b16 %v677, %v673
    %v950 = vpack.c.b16 %v678, %v674
    %v951 = vpack.c.b16 %v679, %v675
    %v952 = vpack.c.b16 %v680, %v676
    %v953 = vpack.c.b16 %v685, %v681
    %v954 = vpack.c.b16 %v686, %v682
    %v955 = vpack.c.b16 %v687, %v683
    %v956 = vpack.c.b16 %v688, %v684
    %v957 = vpack.c.b16 %v693, %v689
    %v958 = vpack.c.b16 %v694, %v690
    %v959 = vpack.c.b16 %v695, %v691
    %v960 = vpack.c.b16 %v696, %v692
    %v961 = vpack.c.b16 %v701, %v697
    %v962 = vpack.c.b16 %v702, %v698
    %v963 = vpack.c.b16 %v703, %v699
    %v964 = vpack.c.b16 %v704, %v700
    %v965 = vpack.c.b16 %v709, %v705
    %v966 = vpack.c.b16 %v710, %v706
    %v967 = vpack.c.b16 %v711, %v707
    %v968 = vpack.c.b16 %v712, %v708
    %v969 = vpack.c.b16 %v717, %v713
    %v970 = vpack.c.b16 %v718, %v714
    %v971 = vpack.c.b16 %v719, %v715
    %v972 = vpack.c.b16 %v720, %v716
    %v973 = vpack.c.b16 %v725, %v721
    %v974 = vpack.c.b16 %v726, %v722
    %v975 = vpack.c.b16 %v727, %v723
    %v976 = vpack.c.b16 %v728, %v724
    %v977 = vpack.c.b16 %v733, %v729
    %v978 = vpack.c.b16 %v734, %v730
    %v979 = vpack.c.b16 %v735, %v731
    %v980 = vpack.c.b16 %v736, %v732
    %v981 = vpack.c.b16 %v741, %v737
    %v982 = vpack.c.b16 %v742, %v738
    %v983 = vpack.c.b16 %v743, %v739
    %v984 = vpack.c.b16 %v744, %v740
    %v985 = vpack.c.b16 %v749, %v745
    %v986 = vpack.c.b16 %v750, %v746
    %v987 = vpack.c.b16 %v751, %v747
    %v988 = vpack.c.b16 %v752, %v748
    %v989 = vpack.c.b16 %v757, %v753
    %v990 = vpack.c.b16 %v758, %v754
    %v991 = vpack.c.b16 %v759, %v755
    %v992 = vpack.c.b16 %v760, %v756
    %v993 = vpack.c.b16 %v765, %v761
    %v994 = vpack.c.b16 %v766, %v762
    %v995 = vpack.c.b16 %v767, %v763
    %v996 = vpack.c.b16 %v768, %v764
    %v997 = vpack.c.b16 %v773, %v769
    %v998 = vpack.c.b16 %v774, %v770
    %v999 = vpack.c.b16 %v775, %v771
    %v1000 = vpack.c.b16 %v776, %v772
    %v1001 = vpack.c.b16 %v781, %v777
    %v1002 = vpack.c.b16 %v782, %v778
    %v1003 = vpack.c.b16 %v783, %v779
    %v1004 = vpack.c.b16 %v784, %v780
    %v1005 = vpack.c.b16 %v789, %v785
    %v1006 = vpack.c.b16 %v790, %v786
    %v1007 = vpack.c.b16 %v791, %v787
    %v1008 = vpack.c.b16 %v792, %v788
    %v1009 = vpack.c.b16 %v797, %v793
    %v1010 = vpack.c.b16 %v798, %v794
    %v1011 = vpack.c.b16 %v799, %v795
    %v1012 = vpack.c.b16 %v800, %v796
    %v1013 = vpack.c.b16 %v805, %v801
    %v1014 = vpack.c.b16 %v806, %v802
    %v1015 = vpack.c.b16 %v807, %v803
    %v1016 = vpack.c.b16 %v808, %v804
    %v1017 = vpack.c.b16 %v813, %v809
    %v1018 = vpack.c.b16 %v814, %v810
    %v1019 = vpack.c.b16 %v815, %v811
    %v1020 = vpack.c.b16 %v816, %v812
    %v1021 = vpack.c.b16 %v821, %v817
    %v1022 = vpack.c.b16 %v822, %v818
    %v1023 = vpack.c.b16 %v823, %v819
    %v1024 = vpack.c.b16 %v824, %v820
    %v1025 = vpack.c.b16 %v829, %v825
    %v1026 = vpack.c.b16 %v830, %v826
    %v1027 = vpack.c.b16 %v831, %v827
    %v1028 = vpack.c.b16 %v832, %v828
    %v1029 = vpack.c.b16 %v837, %v833
    %v1030 = vpack.c.b16 %v838, %v834
    %v1031 = vpack.c.b16 %v839, %v835
    %v1032 = vpack.c.b16 %v840, %v836
    %1225 = vmatpush.bf16.msra.mxu0 %v869
    %1226 = vmatpush.bf16.msra.mxu0 %v865
    %1227 = vmatpush.bf16.msra.mxu0 %v861
    %1228 = vmatpush.bf16.msra.mxu0 %v857
    %1229 = vmatpush.bf16.msra.mxu0 %v853
    %1230 = vmatpush.bf16.msra.mxu0 %v849
    %1231 = vmatpush.bf16.msra.mxu0 %v845
    %1232 = vmatpush.bf16.msra.mxu0 %v841
    %1233 = vmatmul.bf16.gmra.mxu0 %v253
    %v1234 = vpop.f32.mrf.mxu0
    %v1235 = vadd.f32 0.0, %v1234
    %v1236 = vpop.f32.mrf.mxu0
    %1237 = vdwg.mxu0
    %1238 = vmatpush.bf16.msra.mxu0 %v901
    %1239 = vmatpush.bf16.msra.mxu0 %v897
    %1240 = vmatpush.bf16.msra.mxu0 %v893
    %1241 = vmatpush.bf16.msra.mxu0 %v889
    %1242 = vmatpush.bf16.msra.mxu0 %v885
    %1243 = vmatpush.bf16.msra.mxu0 %v881
    %1244 = vmatpush.bf16.msra.mxu0 %v877
    %1245 = vmatpush.bf16.msra.mxu0 %v873
    %1246 = vmatmul.bf16.gmra.mxu0 %v254
    %v1247 = vpop.f32.mrf.mxu0
    %v1248 = vadd.f32 %v1235, %v1247
    %v1249 = vpop.f32.mrf.mxu0
    %1250 = vdwg.mxu0
    %1251 = vmatpush.bf16.msra.mxu0 %v933
    %1252 = vmatpush.bf16.msra.mxu0 %v929
    %1253 = vmatpush.bf16.msra.mxu0 %v925
    %1254 = vmatpush.bf16.msra.mxu0 %v921
    %1255 = vmatpush.bf16.msra.mxu0 %v917
    %1256 = vmatpush.bf16.msra.mxu0 %v913
    %1257 = vmatpush.bf16.msra.mxu0 %v909
    %1258 = vmatpush.bf16.msra.mxu0 %v905
    %1259 = vmatmul.bf16.gmra.mxu0 %v255
    %v1260 = vpop.f32.mrf.mxu0
    %v1261 = vadd.f32 %v1248, %v1260
    %v1262 = vpop.f32.mrf.mxu0
    %1263 = vdwg.mxu0
    %1264 = vmatpush.bf16.msra.mxu0 %v965
    %1265 = vmatpush.bf16.msra.mxu0 %v961
    %1266 = vmatpush.bf16.msra.mxu0 %v957
    %1267 = vmatpush.bf16.msra.mxu0 %v953
    %1268 = vmatpush.bf16.msra.mxu0 %v949
    %1269 = vmatpush.bf16.msra.mxu0 %v945
    %1270 = vmatpush.bf16.msra.mxu0 %v941
    %1271 = vmatpush.bf16.msra.mxu0 %v937
    %1272 = vmatmul.bf16.gmra.mxu0 %v256
    %v1273 = vpop.f32.mrf.mxu0
    %v1274 = vadd.f32 %v1261, %v1273
    %v1275 = vpop.f32.mrf.mxu0
    %1276 = vdwg.mxu0
    %1277 = vmatpush.bf16.msra.mxu0 %v997
    %1278 = vmatpush.bf16.msra.mxu0 %v993
    %1279 = vmatpush.bf16.msra.mxu0 %v989
    %1280 = vmatpush.bf16.msra.mxu0 %v985
    %1281 = vmatpush.bf16.msra.mxu0 %v981
    %1282 = vmatpush.bf16.msra.mxu0 %v977
    %1283 = vmatpush.bf16.msra.mxu0 %v973
    %1284 = vmatpush.bf16.msra.mxu0 %v969
    %1285 = vmatmul.bf16.gmra.mxu0 %v257
    %v1286 = vpop.f32.mrf.mxu0
    %v1287 = vadd.f32 %v1274, %v1286
    %v1288 = vpop.f32.mrf.mxu0
    %1289 = vdwg.mxu0
    %1290 = vmatpush.bf16.msra.mxu0 %v1029
    %1291 = vmatpush.bf16.msra.mxu0 %v1025
    %1292 = vmatpush.bf16.msra.mxu0 %v1021
    %1293 = vmatpush.bf16.msra.mxu0 %v1017
    %1294 = vmatpush.bf16.msra.mxu0 %v1013
    %1295 = vmatpush.bf16.msra.mxu0 %v1009
    %1296 = vmatpush.bf16.msra.mxu0 %v1005
    %1297 = vmatpush.bf16.msra.mxu0 %v1001
    %1298 = vmatmul.bf16.gmra.mxu0 %v258
    %v1299 = vpop.f32.mrf.mxu0
    %v1300 = vadd.f32 %v1287, %v1299
    %v1301 = vpop.f32.mrf.mxu0
    %1302 = vdwg.mxu0
    %1303 = vmatpush.bf16.msra.mxu0 %v870
    %1304 = vmatpush.bf16.msra.mxu0 %v866
    %1305 = vmatpush.bf16.msra.mxu0 %v862
    %1306 = vmatpush.bf16.msra.mxu0 %v858
    %1307 = vmatpush.bf16.msra.mxu0 %v854
    %1308 = vmatpush.bf16.msra.mxu0 %v850
    %1309 = vmatpush.bf16.msra.mxu0 %v846
    %1310 = vmatpush.bf16.msra.mxu0 %v842
    %1311 = vmatmul.bf16.gmra.mxu0 %v253
    %v1312 = vpop.f32.mrf.mxu0
    %v1313 = vadd.f32 0.0, %v1312
    %v1314 = vpop.f32.mrf.mxu0
    %1315 = vdwg.mxu0
    %1316 = vmatpush.bf16.msra.mxu0 %v902
    %1317 = vmatpush.bf16.msra.mxu0 %v898
    %1318 = vmatpush.bf16.msra.mxu0 %v894
    %1319 = vmatpush.bf16.msra.mxu0 %v890
    %1320 = vmatpush.bf16.msra.mxu0 %v886
    %1321 = vmatpush.bf16.msra.mxu0 %v882
    %1322 = vmatpush.bf16.msra.mxu0 %v878
    %1323 = vmatpush.bf16.msra.mxu0 %v874
    %1324 = vmatmul.bf16.gmra.mxu0 %v254
    %v1325 = vpop.f32.mrf.mxu0
    %v1326 = vadd.f32 %v1313, %v1325
    %v1327 = vpop.f32.mrf.mxu0
    %1328 = vdwg.mxu0
    %1329 = vmatpush.bf16.msra.mxu0 %v934
    %1330 = vmatpush.bf16.msra.mxu0 %v930
    %1331 = vmatpush.bf16.msra.mxu0 %v926
    %1332 = vmatpush.bf16.msra.mxu0 %v922
    %1333 = vmatpush.bf16.msra.mxu0 %v918
    %1334 = vmatpush.bf16.msra.mxu0 %v914
    %1335 = vmatpush.bf16.msra.mxu0 %v910
    %1336 = vmatpush.bf16.msra.mxu0 %v906
    %1337 = vmatmul.bf16.gmra.mxu0 %v255
    %v1338 = vpop.f32.mrf.mxu0
    %v1339 = vadd.f32 %v1326, %v1338
    %v1340 = vpop.f32.mrf.mxu0
    %1341 = vdwg.mxu0
    %1342 = vmatpush.bf16.msra.mxu0 %v966
    %1343 = vmatpush.bf16.msra.mxu0 %v962
    %1344 = vmatpush.bf16.msra.mxu0 %v958
    %1345 = vmatpush.bf16.msra.mxu0 %v954
    %1346 = vmatpush.bf16.msra.mxu0 %v950
    %1347 = vmatpush.bf16.msra.mxu0 %v946
    %1348 = vmatpush.bf16.msra.mxu0 %v942
    %1349 = vmatpush.bf16.msra.mxu0 %v938
    %1350 = vmatmul.bf16.gmra.mxu0 %v256
    %v1351 = vpop.f32.mrf.mxu0
    %v1352 = vadd.f32 %v1339, %v1351
    %v1353 = vpop.f32.mrf.mxu0
    %1354 = vdwg.mxu0
    %1355 = vmatpush.bf16.msra.mxu0 %v998
    %1356 = vmatpush.bf16.msra.mxu0 %v994
    %1357 = vmatpush.bf16.msra.mxu0 %v990
    %1358 = vmatpush.bf16.msra.mxu0 %v986
    %1359 = vmatpush.bf16.msra.mxu0 %v982
    %1360 = vmatpush.bf16.msra.mxu0 %v978
    %1361 = vmatpush.bf16.msra.mxu0 %v974
    %1362 = vmatpush.bf16.msra.mxu0 %v970
    %1363 = vmatmul.bf16.gmra.mxu0 %v257
    %v1364 = vpop.f32.mrf.mxu0
    %v1365 = vadd.f32 %v1352, %v1364
    %v1366 = vpop.f32.mrf.mxu0
    %1367 = vdwg.mxu0
    %1368 = vmatpush.bf16.msra.mxu0 %v1030
    %1369 = vmatpush.bf16.msra.mxu0 %v1026
    %1370 = vmatpush.bf16.msra.mxu0 %v1022
    %1371 = vmatpush.bf16.msra.mxu0 %v1018
    %1372 = vmatpush.bf16.msra.mxu0 %v1014
    %1373 = vmatpush.bf16.msra.mxu0 %v1010
    %1374 = vmatpush.bf16.msra.mxu0 %v1006
    %1375 = vmatpush.bf16.msra.mxu0 %v1002
    %1376 = vmatmul.bf16.gmra.mxu0 %v258
    %v1377 = vpop.f32.mrf.mxu0
    %v1378 = vadd.f32 %v1365, %v1377
    %v1379 = vpop.f32.mrf.mxu0
    %1380 = vdwg.mxu0
    %1381 = vmatpush.bf16.msra.mxu0 %v871
    %1382 = vmatpush.bf16.msra.mxu0 %v867
    %1383 = vmatpush.bf16.msra.mxu0 %v863
    %1384 = vmatpush.bf16.msra.mxu0 %v859
    %1385 = vmatpush.bf16.msra.mxu0 %v855
    %1386 = vmatpush.bf16.msra.mxu0 %v851
    %1387 = vmatpush.bf16.msra.mxu0 %v847
    %1388 = vmatpush.bf16.msra.mxu0 %v843
    %1389 = vmatmul.bf16.gmra.mxu0 %v253
    %v1390 = vpop.f32.mrf.mxu0
    %v1391 = vadd.f32 0.0, %v1390
    %v1392 = vpop.f32.mrf.mxu0
    %1393 = vdwg.mxu0
    %1394 = vmatpush.bf16.msra.mxu0 %v903
    %1395 = vmatpush.bf16.msra.mxu0 %v899
    %1396 = vmatpush.bf16.msra.mxu0 %v895
    %1397 = vmatpush.bf16.msra.mxu0 %v891
    %1398 = vmatpush.bf16.msra.mxu0 %v887
    %1399 = vmatpush.bf16.msra.mxu0 %v883
    %1400 = vmatpush.bf16.msra.mxu0 %v879
    %1401 = vmatpush.bf16.msra.mxu0 %v875
    %1402 = vmatmul.bf16.gmra.mxu0 %v254
    %v1403 = vpop.f32.mrf.mxu0
    %v1404 = vadd.f32 %v1391, %v1403
    %v1405 = vpop.f32.mrf.mxu0
    %1406 = vdwg.mxu0
    %1407 = vmatpush.bf16.msra.mxu0 %v935
    %1408 = vmatpush.bf16.msra.mxu0 %v931
    %1409 = vmatpush.bf16.msra.mxu0 %v927
    %1410 = vmatpush.bf16.msra.mxu0 %v923
    %1411 = vmatpush.bf16.msra.mxu0 %v919
    %1412 = vmatpush.bf16.msra.mxu0 %v915
    %1413 = vmatpush.bf16.msra.mxu0 %v911
    %1414 = vmatpush.bf16.msra.mxu0 %v907
    %1415 = vmatmul.bf16.gmra.mxu0 %v255
    %v1416 = vpop.f32.mrf.mxu0
    %v1417 = vadd.f32 %v1404, %v1416
    %v1418 = vpop.f32.mrf.mxu0
    %1419 = vdwg.mxu0
    %1420 = vmatpush.bf16.msra.mxu0 %v967
    %1421 = vmatpush.bf16.msra.mxu0 %v963
    %1422 = vmatpush.bf16.msra.mxu0 %v959
    %1423 = vmatpush.bf16.msra.mxu0 %v955
    %1424 = vmatpush.bf16.msra.mxu0 %v951
    %1425 = vmatpush.bf16.msra.mxu0 %v947
    %1426 = vmatpush.bf16.msra.mxu0 %v943
    %1427 = vmatpush.bf16.msra.mxu0 %v939
    %1428 = vmatmul.bf16.gmra.mxu0 %v256
    %v1429 = vpop.f32.mrf.mxu0
    %v1430 = vadd.f32 %v1417, %v1429
    %v1431 = vpop.f32.mrf.mxu0
    %1432 = vdwg.mxu0
    %1433 = vmatpush.bf16.msra.mxu0 %v999
    %1434 = vmatpush.bf16.msra.mxu0 %v995
    %1435 = vmatpush.bf16.msra.mxu0 %v991
    %1436 = vmatpush.bf16.msra.mxu0 %v987
    %1437 = vmatpush.bf16.msra.mxu0 %v983
    %1438 = vmatpush.bf16.msra.mxu0 %v979
    %1439 = vmatpush.bf16.msra.mxu0 %v975
    %1440 = vmatpush.bf16.msra.mxu0 %v971
    %1441 = vmatmul.bf16.gmra.mxu0 %v257
    %v1442 = vpop.f32.mrf.mxu0
    %v1443 = vadd.f32 %v1430, %v1442
    %v1444 = vpop.f32.mrf.mxu0
    %1445 = vdwg.mxu0
    %1446 = vmatpush.bf16.msra.mxu0 %v1031
    %1447 = vmatpush.bf16.msra.mxu0 %v1027
    %1448 = vmatpush.bf16.msra.mxu0 %v1023
    %1449 = vmatpush.bf16.msra.mxu0 %v1019
    %1450 = vmatpush.bf16.msra.mxu0 %v1015
    %1451 = vmatpush.bf16.msra.mxu0 %v1011
    %1452 = vmatpush.bf16.msra.mxu0 %v1007
    %1453 = vmatpush.bf16.msra.mxu0 %v1003
    %1454 = vmatmul.bf16.gmra.mxu0 %v258
    %v1455 = vpop.f32.mrf.mxu0
    %v1456 = vadd.f32 %v1443, %v1455
    %v1457 = vpop.f32.mrf.mxu0
    %1458 = vdwg.mxu0
    %1459 = vmatpush.bf16.msra.mxu0 %v872
    %1460 = vmatpush.bf16.msra.mxu0 %v868
    %1461 = vmatpush.bf16.msra.mxu0 %v864
    %1462 = vmatpush.bf16.msra.mxu0 %v860
    %1463 = vmatpush.bf16.msra.mxu0 %v856
    %1464 = vmatpush.bf16.msra.mxu0 %v852
    %1465 = vmatpush.bf16.msra.mxu0 %v848
    %1466 = vmatpush.bf16.msra.mxu0 %v844
    %1467 = vmatmul.bf16.gmra.mxu0 %v253
    %v1468 = vpop.f32.mrf.mxu0
    %v1469 = vadd.f32 0.0, %v1468
    %v1470 = vpop.f32.mrf.mxu0
    %1471 = vdwg.mxu0
    %1472 = vmatpush.bf16.msra.mxu0 %v904
    %1473 = vmatpush.bf16.msra.mxu0 %v900
    %1474 = vmatpush.bf16.msra.mxu0 %v896
    %1475 = vmatpush.bf16.msra.mxu0 %v892
    %1476 = vmatpush.bf16.msra.mxu0 %v888
    %1477 = vmatpush.bf16.msra.mxu0 %v884
    %1478 = vmatpush.bf16.msra.mxu0 %v880
    %1479 = vmatpush.bf16.msra.mxu0 %v876
    %1480 = vmatmul.bf16.gmra.mxu0 %v254
    %v1481 = vpop.f32.mrf.mxu0
    %v1482 = vadd.f32 %v1469, %v1481
    %v1483 = vpop.f32.mrf.mxu0
    %1484 = vdwg.mxu0
    %1485 = vmatpush.bf16.msra.mxu0 %v936
    %1486 = vmatpush.bf16.msra.mxu0 %v932
    %1487 = vmatpush.bf16.msra.mxu0 %v928
    %1488 = vmatpush.bf16.msra.mxu0 %v924
    %1489 = vmatpush.bf16.msra.mxu0 %v920
    %1490 = vmatpush.bf16.msra.mxu0 %v916
    %1491 = vmatpush.bf16.msra.mxu0 %v912
    %1492 = vmatpush.bf16.msra.mxu0 %v908
    %1493 = vmatmul.bf16.gmra.mxu0 %v255
    %v1494 = vpop.f32.mrf.mxu0
    %v1495 = vadd.f32 %v1482, %v1494
    %v1496 = vpop.f32.mrf.mxu0
    %1497 = vdwg.mxu0
    %1498 = vmatpush.bf16.msra.mxu0 %v968
    %1499 = vmatpush.bf16.msra.mxu0 %v964
    %1500 = vmatpush.bf16.msra.mxu0 %v960
    %1501 = vmatpush.bf16.msra.mxu0 %v956
    %1502 = vmatpush.bf16.msra.mxu0 %v952
    %1503 = vmatpush.bf16.msra.mxu0 %v948
    %1504 = vmatpush.bf16.msra.mxu0 %v944
    %1505 = vmatpush.bf16.msra.mxu0 %v940
    %1506 = vmatmul.bf16.gmra.mxu0 %v256
    %v1507 = vpop.f32.mrf.mxu0
    %v1508 = vadd.f32 %v1495, %v1507
    %v1509 = vpop.f32.mrf.mxu0
    %1510 = vdwg.mxu0
    %1511 = vmatpush.bf16.msra.mxu0 %v1000
    %1512 = vmatpush.bf16.msra.mxu0 %v996
    %1513 = vmatpush.bf16.msra.mxu0 %v992
    %1514 = vmatpush.bf16.msra.mxu0 %v988
    %1515 = vmatpush.bf16.msra.mxu0 %v984
    %1516 = vmatpush.bf16.msra.mxu0 %v980
    %1517 = vmatpush.bf16.msra.mxu0 %v976
    %1518 = vmatpush.bf16.msra.mxu0 %v972
    %1519 = vmatmul.bf16.gmra.mxu0 %v257
    %v1520 = vpop.f32.mrf.mxu0
    %v1521 = vadd.f32 %v1508, %v1520
    %v1522 = vpop.f32.mrf.mxu0
    %1523 = vdwg.mxu0
    %1524 = vmatpush.bf16.msra.mxu0 %v1032
    %1525 = vmatpush.bf16.msra.mxu0 %v1028
    %1526 = vmatpush.bf16.msra.mxu0 %v1024
    %1527 = vmatpush.bf16.msra.mxu0 %v1020
    %1528 = vmatpush.bf16.msra.mxu0 %v1016
    %1529 = vmatpush.bf16.msra.mxu0 %v1012
    %1530 = vmatpush.bf16.msra.mxu0 %v1008
    %1531 = vmatpush.bf16.msra.mxu0 %v1004
    %1532 = vmatmul.bf16.gmra.mxu0 %v258
    %v1533 = vpop.f32.mrf.mxu0
    %v1534 = vadd.f32 %v1521, %v1533
    %v1535 = vpop.f32.mrf.mxu0
    %1536 = vdwg.mxu0
    %v1537 = vadd.f32 %v45, %v1300
    %v1538 = vadd.f32 %v46, %v1378
    %v1539 = vadd.f32 %v47, %v1456
    %v1540 = vadd.f32 %v48, %v1534
    %1541 = vst [vmem:[#allocation2] sm:$0xff] %v1537
    %1542 = vst [vmem:[#allocation2 + $0x8] sm:$0xff] %v1538
    %1543 = vst [vmem:[#allocation2 + $0x10] sm:$0xff] %v1539
    %1544 = vst [vmem:[#allocation2 + $0x18] sm:$0xff] %v1540
    // Predicated region
    $region30: #{swinres_forward.1} parent=1 // pred_check
      %p1545 = pneg %p37
    $region31: #{swinres_forward.1} parent=1 // pred_check_branch
      %1547 = sbr.rel (%p1545) target = $region33
    $region32: #{swinres_forward.1} parent=1 // pred_region
      %v1548 = vld [vmem:[#allocation2] sm:$0xff]
      %v1549 = vld [vmem:[#allocation2 + $0x8] sm:$0xff]
      %v1550 = vld [vmem:[#allocation2 + $0x10] sm:$0xff]
      %v1551 = vld [vmem:[#allocation2 + $0x18] sm:$0xff]
      %v1552 = vld [vmem:[%s2] sm:$0xf]
      %v1554 = vperm.slane %v1552, 0
      %v1555 = vperm.slane %v1552, 1
      %v1556 = vperm.slane %v1552, 2
      %v1557 = vperm.slane %v1552, 3
      %v1562 = vadd.f32 %v1548, %v1554
      %v1563 = vadd.f32 %v1549, %v1555
      %v1564 = vadd.f32 %v1550, %v1556
      %v1565 = vadd.f32 %v1551, %v1557
      %v1566 = vmax.f32 %v1562, 0.0
      %v1567 = vmax.f32 %v1563, 0.0
      %v1568 = vmax.f32 %v1564, 0.0
      %v1569 = vmax.f32 %v1565, 0.0
      %v1570 = vpack.c.bf16 %v1566, %v1566
      %v1571 = vpack.c.bf16 %v1567, %v1567
      %v1572 = vpack.c.bf16 %v1568, %v1568
      %v1573 = vpack.c.bf16 %v1569, %v1569
      %v1574 = vld [vmem:[%s3] sm:$0xf]
      %v1575 = vld [vmem:[%s3 + $0x4] sm:$0xf]
      %v1576 = vld [vmem:[%s3 + $0x8] sm:$0xf]
      %v1577 = vld [vmem:[%s3 + $0xc] sm:$0xf]
      %v1578 = vld [vmem:[%s3 + $0x10] sm:$0xf]
      %v1579 = vld [vmem:[%s3 + $0x14] sm:$0xf]
      %v1580 = vld [vmem:[%s3 + $0x18] sm:$0xf]
      %v1581 = vld [vmem:[%s3 + $0x1c] sm:$0xf]
      %v1582 = vld [vmem:[%s3 + $0x20] sm:$0xf]
      %v1583 = vld [vmem:[%s3 + $0x24] sm:$0xf]
      %v1584 = vld [vmem:[%s3 + $0x28] sm:$0xf]
      %v1585 = vld [vmem:[%s3 + $0x2c] sm:$0xf]
      %v1586 = vld [vmem:[%s3 + $0x30] sm:$0xf]
      %v1587 = vld [vmem:[%s3 + $0x34] sm:$0xf]
      %v1588 = vld [vmem:[%s3 + $0x38] sm:$0xf]
      %v1589 = vld [vmem:[%s3 + $0x3c] sm:$0xf]
      %v1590 = vld [vmem:[%s3 + $0x40] sm:$0xf]
      %v1591 = vld [vmem:[%s3 + $0x44] sm:$0xf]
      %v1592 = vld [vmem:[%s3 + $0x48] sm:$0xf]
      %v1593 = vld [vmem:[%s3 + $0x4c] sm:$0xf]
      %v1594 = vld [vmem:[%s3 + $0x50] sm:$0xf]
      %v1595 = vld [vmem:[%s3 + $0x54] sm:$0xf]
      %v1596 = vld [vmem:[%s3 + $0x58] sm:$0xf]
      %v1597 = vld [vmem:[%s3 + $0x5c] sm:$0xf]
      %v1598 = vld [vmem:[%s3 + $0x60] sm:$0xf]
      %v1599 = vld [vmem:[%s3 + $0x64] sm:$0xf]
      %v1600 = vld [vmem:[%s3 + $0x68] sm:$0xf]
      %v1601 = vld [vmem:[%s3 + $0x6c] sm:$0xf]
      %v1602 = vld [vmem:[%s3 + $0x70] sm:$0xf]
      %v1603 = vld [vmem:[%s3 + $0x74] sm:$0xf]
      %v1604 = vld [vmem:[%s3 + $0x78] sm:$0xf]
      %v1605 = vld [vmem:[%s3 + $0x7c] sm:$0xf]
      %v1606 = vld [vmem:[%s3 + $0x80] sm:$0xf]
      %v1607 = vld [vmem:[%s3 + $0x84] sm:$0xf]
      %v1608 = vld [vmem:[%s3 + $0x88] sm:$0xf]
      %v1609 = vld [vmem:[%s3 + $0x8c] sm:$0xf]
      %v1610 = vld [vmem:[%s3 + $0x90] sm:$0xf]
      %v1611 = vld [vmem:[%s3 + $0x94] sm:$0xf]
      %v1612 = vld [vmem:[%s3 + $0x98] sm:$0xf]
      %v1613 = vld [vmem:[%s3 + $0x9c] sm:$0xf]
      %v1614 = vld [vmem:[%s3 + $0xa0] sm:$0xf]
      %v1615 = vld [vmem:[%s3 + $0xa4] sm:$0xf]
      %v1616 = vld [vmem:[%s3 + $0xa8] sm:$0xf]
      %v1617 = vld [vmem:[%s3 + $0xac] sm:$0xf]
      %v1618 = vld [vmem:[%s3 + $0xb0] sm:$0xf]
      %v1619 = vld [vmem:[%s3 + $0xb4] sm:$0xf]
      %v1620 = vld [vmem:[%s3 + $0xb8] sm:$0xf]
      %v1621 = vld [vmem:[%s3 + $0xbc] sm:$0xf]
      %v1622 = vld [vmem:[%s3 + $0xc0] sm:$0xf]
      %v1623 = vld [vmem:[%s3 + $0xc4] sm:$0xf]
      %v1624 = vld [vmem:[%s3 + $0xc8] sm:$0xf]
      %v1625 = vld [vmem:[%s3 + $0xcc] sm:$0xf]
      %v1626 = vld [vmem:[%s3 + $0xd0] sm:$0xf]
      %v1627 = vld [vmem:[%s3 + $0xd4] sm:$0xf]
      %v1628 = vld [vmem:[%s3 + $0xd8] sm:$0xf]
      %v1629 = vld [vmem:[%s3 + $0xdc] sm:$0xf]
      %v1630 = vld [vmem:[%s3 + $0xe0] sm:$0xf]
      %v1631 = vld [vmem:[%s3 + $0xe4] sm:$0xf]
      %v1632 = vld [vmem:[%s3 + $0xe8] sm:$0xf]
      %v1633 = vld [vmem:[%s3 + $0xec] sm:$0xf]
      %v1634 = vld [vmem:[%s3 + $0xf0] sm:$0xf]
      %v1635 = vld [vmem:[%s3 + $0xf4] sm:$0xf]
      %v1636 = vld [vmem:[%s3 + $0xf8] sm:$0xf]
      %v1637 = vld [vmem:[%s3 + $0xfc] sm:$0xf]
      %v1638 = vld [vmem:[%s4] sm:$0x1]
      %v1640 = vperm.slane %v1638, 0
      %v1706 = vunpack.c.l.b16 %v1574
      %v1707 = vunpack.c.l.b16 %v1575
      %v1708 = vunpack.c.l.b16 %v1576
      %v1709 = vunpack.c.l.b16 %v1577
      %v1710 = vunpack.c.l.b16 %v1578
      %v1711 = vunpack.c.l.b16 %v1579
      %v1712 = vunpack.c.l.b16 %v1580
      %v1713 = vunpack.c.l.b16 %v1581
      %v1714 = vunpack.c.l.b16 %v1582
      %v1715 = vunpack.c.l.b16 %v1583
      %v1716 = vunpack.c.l.b16 %v1584
      %v1717 = vunpack.c.l.b16 %v1585
      %v1718 = vunpack.c.l.b16 %v1586
      %v1719 = vunpack.c.l.b16 %v1587
      %v1720 = vunpack.c.l.b16 %v1588
      %v1721 = vunpack.c.l.b16 %v1589
      %v1722 = vunpack.c.l.b16 %v1590
      %v1723 = vunpack.c.l.b16 %v1591
      %v1724 = vunpack.c.l.b16 %v1592
      %v1725 = vunpack.c.l.b16 %v1593
      %v1726 = vunpack.c.l.b16 %v1594
      %v1727 = vunpack.c.l.b16 %v1595
      %v1728 = vunpack.c.l.b16 %v1596
      %v1729 = vunpack.c.l.b16 %v1597
      %v1730 = vunpack.c.l.b16 %v1598
      %v1731 = vunpack.c.l.b16 %v1599
      %v1732 = vunpack.c.l.b16 %v1600
      %v1733 = vunpack.c.l.b16 %v1601
      %v1734 = vunpack.c.l.b16 %v1602
      %v1735 = vunpack.c.l.b16 %v1603
      %v1736 = vunpack.c.l.b16 %v1604
      %v1737 = vunpack.c.l.b16 %v1605
      %v1738 = vunpack.c.l.b16 %v1606
      %v1739 = vunpack.c.l.b16 %v1607
      %v1740 = vunpack.c.l.b16 %v1608
      %v1741 = vunpack.c.l.b16 %v1609
      %v1742 = vunpack.c.l.b16 %v1610
      %v1743 = vunpack.c.l.b16 %v1611
      %v1744 = vunpack.c.l.b16 %v1612
      %v1745 = vunpack.c.l.b16 %v1613
      %v1746 = vunpack.c.l.b16 %v1614
      %v1747 = vunpack.c.l.b16 %v1615
      %v1748 = vunpack.c.l.b16 %v1616
      %v1749 = vunpack.c.l.b16 %v1617
      %v1750 = vunpack.c.l.b16 %v1618
      %v1751 = vunpack.c.l.b16 %v1619
      %v1752 = vunpack.c.l.b16 %v1620
      %v1753 = vunpack.c.l.b16 %v1621
      %v1754 = vunpack.c.l.b16 %v1622
      %v1755 = vunpack.c.l.b16 %v1623
      %v1756 = vunpack.c.l.b16 %v1624
      %v1757 = vunpack.c.l.b16 %v1625
      %v1758 = vunpack.c.l.b16 %v1626
      %v1759 = vunpack.c.l.b16 %v1627
      %v1760 = vunpack.c.l.b16 %v1628
      %v1761 = vunpack.c.l.b16 %v1629
      %v1762 = vunpack.c.l.b16 %v1630
      %v1763 = vunpack.c.l.b16 %v1631
      %v1764 = vunpack.c.l.b16 %v1632
      %v1765 = vunpack.c.l.b16 %v1633
      %v1766 = vunpack.c.l.b16 %v1634
      %v1767 = vunpack.c.l.b16 %v1635
      %v1768 = vunpack.c.l.b16 %v1636
      %v1769 = vunpack.c.l.b16 %v1637
      %v1770 = vpack.c.b16 %v1707, %v1706
      %v1771 = vpack.c.b16 %v1709, %v1708
      %v1772 = vpack.c.b16 %v1711, %v1710
      %v1773 = vpack.c.b16 %v1713, %v1712
      %v1774 = vpack.c.b16 %v1715, %v1714
      %v1775 = vpack.c.b16 %v1717, %v1716
      %v1776 = vpack.c.b16 %v1719, %v1718
      %v1777 = vpack.c.b16 %v1721, %v1720
      %v1778 = vpack.c.b16 %v1723, %v1722
      %v1779 = vpack.c.b16 %v1725, %v1724
      %v1780 = vpack.c.b16 %v1727, %v1726
      %v1781 = vpack.c.b16 %v1729, %v1728
      %v1782 = vpack.c.b16 %v1731, %v1730
      %v1783 = vpack.c.b16 %v1733, %v1732
      %v1784 = vpack.c.b16 %v1735, %v1734
      %v1785 = vpack.c.b16 %v1737, %v1736
      %v1786 = vpack.c.b16 %v1739, %v1738
      %v1787 = vpack.c.b16 %v1741, %v1740
      %v1788 = vpack.c.b16 %v1743, %v1742
      %v1789 = vpack.c.b16 %v1745, %v1744
      %v1790 = vpack.c.b16 %v1747, %v1746
      %v1791 = vpack.c.b16 %v1749, %v1748
      %v1792 = vpack.c.b16 %v1751, %v1750
      %v1793 = vpack.c.b16 %v1753, %v1752
      %v1794 = vpack.c.b16 %v1755, %v1754
      %v1795 = vpack.c.b16 %v1757, %v1756
      %v1796 = vpack.c.b16 %v1759, %v1758
      %v1797 = vpack.c.b16 %v1761, %v1760
      %v1798 = vpack.c.b16 %v1763, %v1762
      %v1799 = vpack.c.b16 %v1765, %v1764
      %v1800 = vpack.c.b16 %v1767, %v1766
      %v1801 = vpack.c.b16 %v1769, %v1768
      %1834 = vmatpush.bf16.msra.mxu0 %v1777
      %1835 = vmatpush.bf16.msra.mxu0 %v1776
      %1836 = vmatpush.bf16.msra.mxu0 %v1775
      %1837 = vmatpush.bf16.msra.mxu0 %v1774
      %1838 = vmatpush.bf16.msra.mxu0 %v1773
      %1839 = vmatpush.bf16.msra.mxu0 %v1772
      %1840 = vmatpush.bf16.msra.mxu0 %v1771
      %1841 = vmatpush.bf16.msra.mxu0 %v1770
      %1842 = vmatmul.bf16.gmra.mxu0 %v1570
      %v1843 = vpop.f32.mrf.mxu0
      %v1844 = vadd.f32 %v1640, %v1843
      %v1845 = vpop.f32.mrf.mxu0
      %1846 = vdwg.mxu0
      %1847 = vmatpush.bf16.msra.mxu0 %v1785
      %1848 = vmatpush.bf16.msra.mxu0 %v1784
      %1849 = vmatpush.bf16.msra.mxu0 %v1783
      %1850 = vmatpush.bf16.msra.mxu0 %v1782
      %1851 = vmatpush.bf16.msra.mxu0 %v1781
      %1852 = vmatpush.bf16.msra.mxu0 %v1780
      %1853 = vmatpush.bf16.msra.mxu0 %v1779
      %1854 = vmatpush.bf16.msra.mxu0 %v1778
      %1855 = vmatmul.bf16.gmra.mxu0 %v1571
      %v1856 = vpop.f32.mrf.mxu0
      %v1857 = vadd.f32 %v1844, %v1856
      %v1858 = vpop.f32.mrf.mxu0
      %1859 = vdwg.mxu0
      %1860 = vmatpush.bf16.msra.mxu0 %v1793
      %1861 = vmatpush.bf16.msra.mxu0 %v1792
      %1862 = vmatpush.bf16.msra.mxu0 %v1791
      %1863 = vmatpush.bf16.msra.mxu0 %v1790
      %1864 = vmatpush.bf16.msra.mxu0 %v1789
      %1865 = vmatpush.bf16.msra.mxu0 %v1788
      %1866 = vmatpush.bf16.msra.mxu0 %v1787
      %1867 = vmatpush.bf16.msra.mxu0 %v1786
      %1868 = vmatmul.bf16.gmra.mxu0 %v1572
      %v1869 = vpop.f32.mrf.mxu0
      %v1870 = vadd.f32 %v1857, %v1869
      %v1871 = vpop.f32.mrf.mxu0
      %1872 = vdwg.mxu0
      %1873 = vmatpush.bf16.msra.mxu0 %v1801
      %1874 = vmatpush.bf16.msra.mxu0 %v1800
      %1875 = vmatpush.bf16.msra.mxu0 %v1799
      %1876 = vmatpush.bf16.msra.mxu0 %v1798
      %1877 = vmatpush.bf16.msra.mxu0 %v1797
      %1878 = vmatpush.bf16.msra.mxu0 %v1796
      %1879 = vmatpush.bf16.msra.mxu0 %v1795
      %1880 = vmatpush.bf16.msra.mxu0 %v1794
      %1881 = vmatmul.bf16.gmra.mxu0 %v1573
      %v1882 = vpop.f32.mrf.mxu0
      %v1883 = vadd.f32 %v1870, %v1882
      %v1884 = vpop.f32.mrf.mxu0
      %1885 = vdwg.mxu0
      %vm1886 = vcmask 39936
      %1887 = vst.msk [vmem:[#allocation6] sm:$0xff] %vm1886, %v1883
    $region33: #{swinres_forward.1} parent=1 // pred_fallthru
      _
    // Predicated region
    $region34: #{swinres_forward.1} parent=1 // pred_check
      _
    $region35: #{swinres_forward.1} parent=1 // pred_check_branch
      %1889 = sbr.rel (0) target = $region37
    $region36: #{swinres_forward.1} parent=1 // pred_region
      %1891 = vsyncadd [#allocation5], 0
      %s1893 = sshll.u32 [#allocation6], 4
      %s1894 = int_to_ptr.vmem [resolvable:$true] %s1893
      %s1895 = sshll.u32 %s5, 4
      %s1896 = int_to_ptr.hbm [resolvable:$true] %s1895
      %1898 = dma.vmem_to_hbm [thread:$0]  %s1894, 128, %s1896, [#allocation5]
    $region37: #{swinres_forward.1} parent=1 // pred_fallthru
      _
    // Predicated region
    $region38: #{swinres_forward.1} parent=1 // pred_check
      _
    $region39: #{swinres_forward.1} parent=1 // pred_check_branch
      %1900 = sbr.rel (0) target = $region41
    $region40: #{swinres_forward.1} parent=1 // pred_region
      %1902 = dma.done [#allocation5], 128
    $region41: #{swinres_forward.1} parent=1 // pred_fallthru
      _
    %1903 = vsyncpa [#allocation4], 1
    %1904 = vsyncpa [#allocation5], 1

</llo_original>
